<compile_context>
chip_gen: v5e
topology: v5e:2x2
jax: 0.10.0
libtpu: 0.0.40
codegen_flags: <defaults>
</compile_context>

<pallas_src>
import jax
import jax.numpy as jnp
from jax import lax
from jax.experimental import pallas as pl
from jax.experimental.pallas import tpu as pltpu


def _round_up(x, m):
    return ((x + m - 1) // m) * m


def _pack_rows(pieces):
    """Stack 2-D f32 pieces into one (rows, width) slab at 8-row-aligned offsets.

    Returns (slab, offsets); offsets[i] = (row0, n_rows, n_cols) of pieces[i].
    """
    width = max(int(p.shape[1]) for p in pieces)
    offs, rows = [], 0
    for p in pieces:
        r, c = int(p.shape[0]), int(p.shape[1])
        offs.append((rows, r, c))
        rows += _round_up(r, 8)
    slab = jnp.zeros((_round_up(rows, 8), width), jnp.float32)
    for p, (r0, r, c) in zip(pieces, offs):
        slab = slab.at[r0:r0 + r, 0:c].set(p.astype(jnp.float32))
    return slab, offs


def wcondnet_forward(x_nchw, params, *, samples_per_step=None):
    """Pallas implementation of WCondNet.forward (do_lu=False path).

    x_nchw : (N, Cin, H, W) cond input (PyTorch NCHW layout).
    params : PyTorch-layout parameters (conv OIHW / linear (out, in)).
    returns: (N, Cin, Cin), like the PyTorch module.
    """
    (w1, b1, w2, b2, w3, b3, L1, lb1, L2, lb2, L3, lb3, L4, lb4) = params
    N, Cin, H, W = x_nchw.shape
    C1, C2, C3 = w1.shape[0], w2.shape[0], w3.shape[0]
    HV, WV = H - 4, W - 4                       # conv3 valid output spatial size
    HW = H * W
    F1, F2, F3 = L1.shape[0], L2.shape[0], L3.shape[0]
    CC = L4.shape[0]
    Csq = int(round(CC ** 0.5))

    # Grid blocking: NB samples per step.  Default keeps 2 "parallel" steps so
    # the batch shards across both TensorCores on v7x; on single-TC v5e/v6e pass
    # samples_per_step=N (one step) since extra steps are pure overhead there.
    if samples_per_step is None:
        samples_per_step = pl.cdiv(N, 2) if N >= 2 else 1
    NB = int(samples_per_step)
    num_steps = pl.cdiv(N, NB)
    N_pad = num_steps * NB

    x3 = x_nchw.reshape(N, Cin, HW)             # pure reshape of native NCHW (lane-dense)
    if N_pad != N:
        x3 = jnp.concatenate([x3, jnp.zeros((N_pad - N, Cin, HW), x3.dtype)], axis=0)

    # ------------- parameter packing (host side, tiny tensors, done once) -------------
    # Conv activations are (C*NB, H*W): channel-major rows (so the per-sample
    # flatten is a contiguous row slice), spatial on lanes.  Conv weights become
    # per-tap block-diagonal-over-batch matrices.
    # TODO(synk): for very large NB the kron'd weights grow as NB^2; switch to a
    # batched-dot formulation in that regime.
    eye = jnp.eye(NB, dtype=jnp.float32)
    w1_2d = w1.reshape(C1, Cin).astype(jnp.float32)
    # rows (c1, n), cols (n', cin): sample-major input rows -> channel-major output rows
    w1_bd = (w1_2d[:, None, None, :] * eye[None, :, :, None]).reshape(C1 * NB, NB * Cin)
    w2_taps = [jnp.kron(w2[:, :, t // 3, t % 3].astype(jnp.float32), eye) for t in range(9)]
    w3_taps = [jnp.kron(w3[:, :, t // 3, t % 3].astype(jnp.float32), eye) for t in range(9)]
    b1c = jnp.repeat(b1.astype(jnp.float32), NB).reshape(C1 * NB, 1)
    b2c = jnp.repeat(b2.astype(jnp.float32), NB).reshape(C2 * NB, 1)
    b3c = jnp.repeat(b3.astype(jnp.float32), NB).reshape(C3 * NB, 1)
    conv_slab, conv_offs = _pack_rows([w1_bd] + w2_taps + w3_taps + [b1c, b2c, b3c])
    off_w1 = conv_offs[0]
    off_w2 = conv_offs[1:10]
    off_w3 = conv_offs[10:19]
    off_b1, off_b2, off_b3 = conv_offs[19:22]

    # Linear slab.  NCHW flatten + valid-window selection folded into a
    # zero-embedded L1 of shape (C3*H*W, F1); remaining weights are transposed
    # once here so the kernel runs batch-major (NB, F) matmuls.
    L1_emb = jnp.zeros((F1, C3, H, W), jnp.float32)
    L1_emb = L1_emb.at[:, :, :HV, :WV].set(L1.reshape(F1, C3, HV, WV).astype(jnp.float32))
    L1_emb = jnp.transpose(L1_emb, (1, 2, 3, 0)).reshape(C3 * HW, F1)
    lin_slab, lin_offs = _pack_rows(
        [L1_emb, L2.T, L3.T, L4.T,
         lb1.reshape(1, F1), lb2.reshape(1, F2), lb3.reshape(1, F3), lb4.reshape(1, CC)])
    off_l1, off_l2, off_l3, off_l4, off_lb1, off_lb2, off_lb3, off_lb4 = lin_offs

    def rd(ref, off):
        r0, nr, nc = off
        return ref[r0:r0 + nr, 0:nc]

    def kernel(x_ref, cw_ref, lw_ref, o_ref):
        # x_ref : (NB, Cin, H*W) block of the native-NCHW input.
        x = x_ref[...].reshape(NB * Cin, HW).astype(jnp.float32)

        # conv1 (1x1) + ReLU: one matmul; output rows (c1, n), spatial on lanes.
        h = jnp.dot(rd(cw_ref, off_w1), x, preferred_element_type=jnp.float32)
        h = jnp.maximum(h + rd(cw_ref, off_b1), 0.0)            # (C1*NB, HW)

        # 3x3 valid convs as 9 accumulated tap matmuls on lane-rolled views.
        # Positions outside the valid window hold finite garbage that the
        # zero-embedded L1 weight multiplies by 0 later.
        def conv3x3(h_in, tap_offs, bias_off):
            acc = None
            for t, toff in enumerate(tap_offs):
                d = (t // 3) * W + (t % 3)
                src = h_in if d == 0 else pltpu.roll(h_in, HW - d, axis=1)
                term = jnp.dot(rd(cw_ref, toff), src,
                               preferred_element_type=jnp.float32)
                acc = term if acc is None else acc + term
            return jnp.maximum(acc + rd(cw_ref, bias_off), 0.0)

        h = conv3x3(h, off_w2, off_b2)                          # (C2*NB, HW)
        h = conv3x3(h, off_w3, off_b3)                          # (C3*NB, HW)

        # linear1: per-channel contiguous row slice @ zero-embedded L1 block.
        r0, _, nc = off_l1
        acc = None
        for c in range(C3):
            hc = h[c * NB:(c + 1) * NB, :]                      # (NB, HW)
            lc = lw_ref[r0 + c * HW: r0 + (c + 1) * HW, 0:nc]   # (HW, F1)
            term = jnp.dot(hc, lc, preferred_element_type=jnp.float32)
            acc = term if acc is None else acc + term
        z = jnp.maximum(acc + rd(lw_ref, off_lb1), 0.0)         # (NB, F1)

        # remaining linears: batch-major, lane-dense (NB, 64/48/16) activations.
        z = jnp.maximum(jnp.dot(z, rd(lw_ref, off_l2),
                                preferred_element_type=jnp.float32)
                        + rd(lw_ref, off_lb2), 0.0)
        z = jnp.maximum(jnp.dot(z, rd(lw_ref, off_l3),
                                preferred_element_type=jnp.float32)
                        + rd(lw_ref, off_lb3), 0.0)
        z = jnp.dot(z, rd(lw_ref, off_l4),
                    preferred_element_type=jnp.float32) + rd(lw_ref, off_lb4)

        o_ref[...] = z.reshape(1, NB, CC).astype(o_ref.dtype)

    out = pl.pallas_call(
        kernel,
        out_shape=jax.ShapeDtypeStruct((num_steps, NB, CC), x_nchw.dtype),
        grid=(num_steps,),
        in_specs=[
            pl.BlockSpec((NB, Cin, HW), lambda i: (i, 0, 0)),
            pl.BlockSpec(conv_slab.shape, lambda i: (0, 0)),    # resident across steps
            pl.BlockSpec(lin_slab.shape, lambda i: (0, 0)),     # resident across steps
        ],
        out_specs=pl.BlockSpec((1, NB, CC), lambda i: (i, 0, 0)),
        compiler_params=pltpu.CompilerParams(
            dimension_semantics=("parallel",),        # batch across TCs on v7x
            vmem_limit_bytes=32 * 1024 * 1024,        # per-step footprint << 1 MiB
        ),
    )(x3, conv_slab, lin_slab)

    return out.reshape(N_pad, CC)[:N].reshape(N, Csq, Csq)


def reference_forward(x, params):
    """Pure-JAX reference matching the PyTorch WCondNet.forward exactly."""
    (w1, b1, w2, b2, w3, b3, L1, lb1, L2, lb2, L3, lb3, L4, lb4) = params
    dn = ("NCHW", "OIHW", "NCHW")
    h = lax.conv_general_dilated(x, w1, (1, 1), "VALID", dimension_numbers=dn)
    h = jnp.maximum(h + b1.reshape(1, -1, 1, 1), 0.0)
    h = lax.conv_general_dilated(h, w2, (1, 1), "VALID", dimension_numbers=dn)
    h = jnp.maximum(h + b2.reshape(1, -1, 1, 1), 0.0)
    h = lax.conv_general_dilated(h, w3, (1, 1), "VALID", dimension_numbers=dn)
    h = jnp.maximum(h + b3.reshape(1, -1, 1, 1), 0.0)
    flat = h.reshape(h.shape[0], -1)                  # NCHW flatten, like .view
    z = jnp.maximum(flat @ L1.T + lb1, 0.0)
    z = jnp.maximum(z @ L2.T + lb2, 0.0)
    z = jnp.maximum(z @ L3.T + lb3, 0.0)
    z = z @ L4.T + lb4
    C = int(round(L4.shape[0] ** 0.5))
    return z.reshape(z.shape[0], C, C)


if __name__ == "__main__":
    # cond_shape = inp_shape = (4, 16, 16), batch = 2.
    # ConvNet channel plan: Cin -> 8 -> 4 -> 2; spatial 16 -> 14 -> 12.
    N, Cin, H, W = 2, 4, 16, 16
    C1, C2, C3 = 8, 4, 2
    flat_len = C3 * (H - 4) * (W - 4)     # 288
    CC = Cin * Cin                        # 16 (condition='w' -> inp_channels**2)

    key = jax.random.PRNGKey(0)
    ks = jax.random.split(key, 16)

    x = jax.random.normal(ks[0], (N, Cin, H, W), jnp.float32)

    w1 = 0.3 * jax.random.normal(ks[1], (C1, Cin, 1, 1), jnp.float32)
    b1 = 0.1 * jax.random.normal(ks[2], (C1,), jnp.float32)
    w2 = 0.2 * jax.random.normal(ks[3], (C2, C1, 3, 3), jnp.float32)
    b2 = 0.1 * jax.random.normal(ks[4], (C2,), jnp.float32)
    w3 = 0.2 * jax.random.normal(ks[5], (C3, C2, 3, 3), jnp.float32)
    b3 = 0.1 * jax.random.normal(ks[6], (C3,), jnp.float32)

    L1 = 0.05 * jax.random.normal(ks[7], (32, flat_len), jnp.float32)
    lb1 = 0.1 * jax.random.normal(ks[8], (32,), jnp.float32)
    L2 = 0.1 * jax.random.normal(ks[9], (64, 32), jnp.float32)
    lb2 = 0.1 * jax.random.normal(ks[10], (64,), jnp.float32)
    L3 = 0.1 * jax.random.normal(ks[11], (48, 64), jnp.float32)
    lb3 = 0.1 * jax.random.normal(ks[12], (48,), jnp.float32)
    # TODO(synk): ZeroWeightLinear zero-initializes this weight (output would then
    # ignore the input); small non-zero values exercise every layer of the kernel.
    # The 'qr' bias init is reproduced faithfully.
    L4 = 0.1 * jax.random.normal(ks[13], (CC, 48), jnp.float32)
    q, _ = jnp.linalg.qr(jax.random.normal(ks[14], (Cin, Cin), jnp.float32))
    lb4 = q.reshape(CC)

    params = (w1, b1, w2, b2, w3, b3, L1, lb1, L2, lb2, L3, lb3, L4, lb4)

    ref = reference_forward(x, params)

    # Default: 2 "parallel" grid steps (feeds both TensorCores on v7x), NB=1 each.
    out = jax.block_until_ready(wcondnet_forward(x, params))
    assert out.shape == (N, Cin, Cin), out.shape
    err = float(jnp.max(jnp.abs(out - ref)))
    assert jnp.allclose(out, ref, atol=1e-3, rtol=1e-3), err

    # Single grid step with both samples batched (best choice on 1-TC v5e/v6e).
    out1 = jax.block_until_ready(wcondnet_forward(x, params, samples_per_step=N))
    err1 = float(jnp.max(jnp.abs(out1 - ref)))
    assert jnp.allclose(out1, ref, atol=1e-3, rtol=1e-3), err1

    print("KERNEL_OK")
</pallas_src>

<mosaic_0001>
module attributes {stable_mosaic.version = 11 : i64} {
  func.func @kernel(%arg0: i32, %arg1: memref<1x4x256xf32, #tpu.memory_space<vmem>>, %arg2: memref<176x8xf32, #tpu.memory_space<vmem>>, %arg3: memref<688x64xf32, #tpu.memory_space<vmem>>, %arg4: memref<1x1x16xf32, #tpu.memory_space<vmem>>) attributes {dimension_semantics = [#tpu.dimension_semantics<parallel>], iteration_bounds = array<i64: 2>, scalar_prefetch = 0 : i64, scratch_operands = 0 : i64, tpu.core_type = #tpu.core_type<tc>, window_params = [{transform_indices = @transform_0, window_bounds = array<i64: 1, 4, 256>}, {pipeline_mode = #tpu.pipeline_mode<synchronous>, transform_indices = @transform_1, window_bounds = array<i64: 176, 8>}, {pipeline_mode = #tpu.pipeline_mode<synchronous>, transform_indices = @transform_2, window_bounds = array<i64: 688, 64>}, {transform_indices = @transform_3, window_bounds = array<i64: 1, 1, 16>}]} {
    %c0 = arith.constant 0 : index
    %c0_0 = arith.constant 0 : index
    %c0_1 = arith.constant 0 : index
    %0 = vector.load %arg1[%c0, %c0_0, %c0_1] : memref<1x4x256xf32, #tpu.memory_space<vmem>>, vector<1x4x256xf32>
    %1 = vector.shape_cast %0 : vector<1x4x256xf32> to vector<4x256xf32>
    %c0_2 = arith.constant 0 : index
    %c0_3 = arith.constant 0 : index
    %2 = vector.load %arg2[%c0_2, %c0_3] : memref<176x8xf32, #tpu.memory_space<vmem>>, vector<8x4xf32>
    %cst = arith.constant dense<0.000000e+00> : vector<8x256xf32>
    %3 = tpu.matmul %2, %1, %cst {dimension_numbers = #tpu.dot_dimension_numbers<[1], [0], [0], [1], [0, 0, 1, 1], [], []>} : vector<8x4xf32>, vector<4x256xf32>, vector<8x256xf32> -> vector<8x256xf32>
    %c152 = arith.constant 152 : index
    %c0_4 = arith.constant 0 : index
    %4 = vector.load %arg2[%c152, %c0_4] : memref<176x8xf32, #tpu.memory_space<vmem>>, vector<8x1xf32>
    %5 = vector.broadcast %4 : vector<8x1xf32> to vector<8x256xf32>
    %6 = arith.addf %3, %5 : vector<8x256xf32>
    %cst_5 = arith.constant 0.000000e+00 : f32
    %7 = vector.broadcast %cst_5 : f32 to vector<8x256xf32>
    %8 = arith.maximumf %6, %7 : vector<8x256xf32>
    %c8 = arith.constant 8 : index
    %c0_6 = arith.constant 0 : index
    %9 = vector.load %arg2[%c8, %c0_6] : memref<176x8xf32, #tpu.memory_space<vmem>>, vector<4x8xf32>
    %cst_7 = arith.constant dense<0.000000e+00> : vector<4x256xf32>
    %10 = tpu.matmul %9, %8, %cst_7 {dimension_numbers = #tpu.dot_dimension_numbers<[1], [0], [0], [1], [0, 0, 1, 1], [], []>} : vector<4x8xf32>, vector<8x256xf32>, vector<4x256xf32> -> vector<4x256xf32>
    %c255_i32 = arith.constant 255 : i32
    %11 = tpu.dynamic_rotate %8 by %c255_i32 dim 1 : vector<8x256xf32>, i32 -> vector<8x256xf32>
    %c16 = arith.constant 16 : index
    %c0_8 = arith.constant 0 : index
    %12 = vector.load %arg2[%c16, %c0_8] : memref<176x8xf32, #tpu.memory_space<vmem>>, vector<4x8xf32>
    %cst_9 = arith.constant dense<0.000000e+00> : vector<4x256xf32>
    %13 = tpu.matmul %12, %11, %cst_9 {dimension_numbers = #tpu.dot_dimension_numbers<[1], [0], [0], [1], [0, 0, 1, 1], [], []>} : vector<4x8xf32>, vector<8x256xf32>, vector<4x256xf32> -> vector<4x256xf32>
    %14 = arith.addf %10, %13 : vector<4x256xf32>
    %c254_i32 = arith.constant 254 : i32
    %15 = tpu.dynamic_rotate %8 by %c254_i32 dim 1 : vector<8x256xf32>, i32 -> vector<8x256xf32>
    %c24 = arith.constant 24 : index
    %c0_10 = arith.constant 0 : index
    %16 = vector.load %arg2[%c24, %c0_10] : memref<176x8xf32, #tpu.memory_space<vmem>>, vector<4x8xf32>
    %cst_11 = arith.constant dense<0.000000e+00> : vector<4x256xf32>
    %17 = tpu.matmul %16, %15, %cst_11 {dimension_numbers = #tpu.dot_dimension_numbers<[1], [0], [0], [1], [0, 0, 1, 1], [], []>} : vector<4x8xf32>, vector<8x256xf32>, vector<4x256xf32> -> vector<4x256xf32>
    %18 = arith.addf %14, %17 : vector<4x256xf32>
    %c240_i32 = arith.constant 240 : i32
    %19 = tpu.dynamic_rotate %8 by %c240_i32 dim 1 : vector<8x256xf32>, i32 -> vector<8x256xf32>
    %c32 = arith.constant 32 : index
    %c0_12 = arith.constant 0 : index
    %20 = vector.load %arg2[%c32, %c0_12] : memref<176x8xf32, #tpu.memory_space<vmem>>, vector<4x8xf32>
    %cst_13 = arith.constant dense<0.000000e+00> : vector<4x256xf32>
    %21 = tpu.matmul %20, %19, %cst_13 {dimension_numbers = #tpu.dot_dimension_numbers<[1], [0], [0], [1], [0, 0, 1, 1], [], []>} : vector<4x8xf32>, vector<8x256xf32>, vector<4x256xf32> -> vector<4x256xf32>
    %22 = arith.addf %18, %21 : vector<4x256xf32>
    %c239_i32 = arith.constant 239 : i32
    %23 = tpu.dynamic_rotate %8 by %c239_i32 dim 1 : vector<8x256xf32>, i32 -> vector<8x256xf32>
    %c40 = arith.constant 40 : index
    %c0_14 = arith.constant 0 : index
    %24 = vector.load %arg2[%c40, %c0_14] : memref<176x8xf32, #tpu.memory_space<vmem>>, vector<4x8xf32>
    %cst_15 = arith.constant dense<0.000000e+00> : vector<4x256xf32>
    %25 = tpu.matmul %24, %23, %cst_15 {dimension_numbers = #tpu.dot_dimension_numbers<[1], [0], [0], [1], [0, 0, 1, 1], [], []>} : vector<4x8xf32>, vector<8x256xf32>, vector<4x256xf32> -> vector<4x256xf32>
    %26 = arith.addf %22, %25 : vector<4x256xf32>
    %c238_i32 = arith.constant 238 : i32
    %27 = tpu.dynamic_rotate %8 by %c238_i32 dim 1 : vector<8x256xf32>, i32 -> vector<8x256xf32>
    %c48 = arith.constant 48 : index
    %c0_16 = arith.constant 0 : index
    %28 = vector.load %arg2[%c48, %c0_16] : memref<176x8xf32, #tpu.memory_space<vmem>>, vector<4x8xf32>
    %cst_17 = arith.constant dense<0.000000e+00> : vector<4x256xf32>
    %29 = tpu.matmul %28, %27, %cst_17 {dimension_numbers = #tpu.dot_dimension_numbers<[1], [0], [0], [1], [0, 0, 1, 1], [], []>} : vector<4x8xf32>, vector<8x256xf32>, vector<4x256xf32> -> vector<4x256xf32>
    %30 = arith.addf %26, %29 : vector<4x256xf32>
    %c224_i32 = arith.constant 224 : i32
    %31 = tpu.dynamic_rotate %8 by %c224_i32 dim 1 : vector<8x256xf32>, i32 -> vector<8x256xf32>
    %c56 = arith.constant 56 : index
    %c0_18 = arith.constant 0 : index
    %32 = vector.load %arg2[%c56, %c0_18] : memref<176x8xf32, #tpu.memory_space<vmem>>, vector<4x8xf32>
    %cst_19 = arith.constant dense<0.000000e+00> : vector<4x256xf32>
    %33 = tpu.matmul %32, %31, %cst_19 {dimension_numbers = #tpu.dot_dimension_numbers<[1], [0], [0], [1], [0, 0, 1, 1], [], []>} : vector<4x8xf32>, vector<8x256xf32>, vector<4x256xf32> -> vector<4x256xf32>
    %34 = arith.addf %30, %33 : vector<4x256xf32>
    %c223_i32 = arith.constant 223 : i32
    %35 = tpu.dynamic_rotate %8 by %c223_i32 dim 1 : vector<8x256xf32>, i32 -> vector<8x256xf32>
    %c64 = arith.constant 64 : index
    %c0_20 = arith.constant 0 : index
    %36 = vector.load %arg2[%c64, %c0_20] : memref<176x8xf32, #tpu.memory_space<vmem>>, vector<4x8xf32>
    %cst_21 = arith.constant dense<0.000000e+00> : vector<4x256xf32>
    %37 = tpu.matmul %36, %35, %cst_21 {dimension_numbers = #tpu.dot_dimension_numbers<[1], [0], [0], [1], [0, 0, 1, 1], [], []>} : vector<4x8xf32>, vector<8x256xf32>, vector<4x256xf32> -> vector<4x256xf32>
    %38 = arith.addf %34, %37 : vector<4x256xf32>
    %c222_i32 = arith.constant 222 : i32
    %39 = tpu.dynamic_rotate %8 by %c222_i32 dim 1 : vector<8x256xf32>, i32 -> vector<8x256xf32>
    %c72 = arith.constant 72 : index
    %c0_22 = arith.constant 0 : index
    %40 = vector.load %arg2[%c72, %c0_22] : memref<176x8xf32, #tpu.memory_space<vmem>>, vector<4x8xf32>
    %cst_23 = arith.constant dense<0.000000e+00> : vector<4x256xf32>
    %41 = tpu.matmul %40, %39, %cst_23 {dimension_numbers = #tpu.dot_dimension_numbers<[1], [0], [0], [1], [0, 0, 1, 1], [], []>} : vector<4x8xf32>, vector<8x256xf32>, vector<4x256xf32> -> vector<4x256xf32>
    %42 = arith.addf %38, %41 : vector<4x256xf32>
    %c160 = arith.constant 160 : index
    %c0_24 = arith.constant 0 : index
    %43 = vector.load %arg2[%c160, %c0_24] : memref<176x8xf32, #tpu.memory_space<vmem>>, vector<4x1xf32>
    %44 = vector.broadcast %43 : vector<4x1xf32> to vector<4x256xf32>
    %45 = arith.addf %42, %44 : vector<4x256xf32>
    %cst_25 = arith.constant 0.000000e+00 : f32
    %46 = vector.broadcast %cst_25 : f32 to vector<4x256xf32>
    %47 = arith.maximumf %45, %46 : vector<4x256xf32>
    %c80 = arith.constant 80 : index
    %c0_26 = arith.constant 0 : index
    %48 = vector.load %arg2[%c80, %c0_26] : memref<176x8xf32, #tpu.memory_space<vmem>>, vector<2x4xf32>
    %cst_27 = arith.constant dense<0.000000e+00> : vector<2x256xf32>
    %49 = tpu.matmul %48, %47, %cst_27 {dimension_numbers = #tpu.dot_dimension_numbers<[1], [0], [0], [1], [0, 0, 1, 1], [], []>} : vector<2x4xf32>, vector<4x256xf32>, vector<2x256xf32> -> vector<2x256xf32>
    %c255_i32_28 = arith.constant 255 : i32
    %50 = tpu.dynamic_rotate %47 by %c255_i32_28 dim 1 : vector<4x256xf32>, i32 -> vector<4x256xf32>
    %c88 = arith.constant 88 : index
    %c0_29 = arith.constant 0 : index
    %51 = vector.load %arg2[%c88, %c0_29] : memref<176x8xf32, #tpu.memory_space<vmem>>, vector<2x4xf32>
    %cst_30 = arith.constant dense<0.000000e+00> : vector<2x256xf32>
    %52 = tpu.matmul %51, %50, %cst_30 {dimension_numbers = #tpu.dot_dimension_numbers<[1], [0], [0], [1], [0, 0, 1, 1], [], []>} : vector<2x4xf32>, vector<4x256xf32>, vector<2x256xf32> -> vector<2x256xf32>
    %53 = arith.addf %49, %52 : vector<2x256xf32>
    %c254_i32_31 = arith.constant 254 : i32
    %54 = tpu.dynamic_rotate %47 by %c254_i32_31 dim 1 : vector<4x256xf32>, i32 -> vector<4x256xf32>
    %c96 = arith.constant 96 : index
    %c0_32 = arith.constant 0 : index
    %55 = vector.load %arg2[%c96, %c0_32] : memref<176x8xf32, #tpu.memory_space<vmem>>, vector<2x4xf32>
    %cst_33 = arith.constant dense<0.000000e+00> : vector<2x256xf32>
    %56 = tpu.matmul %55, %54, %cst_33 {dimension_numbers = #tpu.dot_dimension_numbers<[1], [0], [0], [1], [0, 0, 1, 1], [], []>} : vector<2x4xf32>, vector<4x256xf32>, vector<2x256xf32> -> vector<2x256xf32>
    %57 = arith.addf %53, %56 : vector<2x256xf32>
    %c240_i32_34 = arith.constant 240 : i32
    %58 = tpu.dynamic_rotate %47 by %c240_i32_34 dim 1 : vector<4x256xf32>, i32 -> vector<4x256xf32>
    %c104 = arith.constant 104 : index
    %c0_35 = arith.constant 0 : index
    %59 = vector.load %arg2[%c104, %c0_35] : memref<176x8xf32, #tpu.memory_space<vmem>>, vector<2x4xf32>
    %cst_36 = arith.constant dense<0.000000e+00> : vector<2x256xf32>
    %60 = tpu.matmul %59, %58, %cst_36 {dimension_numbers = #tpu.dot_dimension_numbers<[1], [0], [0], [1], [0, 0, 1, 1], [], []>} : vector<2x4xf32>, vector<4x256xf32>, vector<2x256xf32> -> vector<2x256xf32>
    %61 = arith.addf %57, %60 : vector<2x256xf32>
    %c239_i32_37 = arith.constant 239 : i32
    %62 = tpu.dynamic_rotate %47 by %c239_i32_37 dim 1 : vector<4x256xf32>, i32 -> vector<4x256xf32>
    %c112 = arith.constant 112 : index
    %c0_38 = arith.constant 0 : index
    %63 = vector.load %arg2[%c112, %c0_38] : memref<176x8xf32, #tpu.memory_space<vmem>>, vector<2x4xf32>
    %cst_39 = arith.constant dense<0.000000e+00> : vector<2x256xf32>
    %64 = tpu.matmul %63, %62, %cst_39 {dimension_numbers = #tpu.dot_dimension_numbers<[1], [0], [0], [1], [0, 0, 1, 1], [], []>} : vector<2x4xf32>, vector<4x256xf32>, vector<2x256xf32> -> vector<2x256xf32>
    %65 = arith.addf %61, %64 : vector<2x256xf32>
    %c238_i32_40 = arith.constant 238 : i32
    %66 = tpu.dynamic_rotate %47 by %c238_i32_40 dim 1 : vector<4x256xf32>, i32 -> vector<4x256xf32>
    %c120 = arith.constant 120 : index
    %c0_41 = arith.constant 0 : index
    %67 = vector.load %arg2[%c120, %c0_41] : memref<176x8xf32, #tpu.memory_space<vmem>>, vector<2x4xf32>
    %cst_42 = arith.constant dense<0.000000e+00> : vector<2x256xf32>
    %68 = tpu.matmul %67, %66, %cst_42 {dimension_numbers = #tpu.dot_dimension_numbers<[1], [0], [0], [1], [0, 0, 1, 1], [], []>} : vector<2x4xf32>, vector<4x256xf32>, vector<2x256xf32> -> vector<2x256xf32>
    %69 = arith.addf %65, %68 : vector<2x256xf32>
    %c224_i32_43 = arith.constant 224 : i32
    %70 = tpu.dynamic_rotate %47 by %c224_i32_43 dim 1 : vector<4x256xf32>, i32 -> vector<4x256xf32>
    %c128 = arith.constant 128 : index
    %c0_44 = arith.constant 0 : index
    %71 = vector.load %arg2[%c128, %c0_44] : memref<176x8xf32, #tpu.memory_space<vmem>>, vector<2x4xf32>
    %cst_45 = arith.constant dense<0.000000e+00> : vector<2x256xf32>
    %72 = tpu.matmul %71, %70, %cst_45 {dimension_numbers = #tpu.dot_dimension_numbers<[1], [0], [0], [1], [0, 0, 1, 1], [], []>} : vector<2x4xf32>, vector<4x256xf32>, vector<2x256xf32> -> vector<2x256xf32>
    %73 = arith.addf %69, %72 : vector<2x256xf32>
    %c223_i32_46 = arith.constant 223 : i32
    %74 = tpu.dynamic_rotate %47 by %c223_i32_46 dim 1 : vector<4x256xf32>, i32 -> vector<4x256xf32>
    %c136 = arith.constant 136 : index
    %c0_47 = arith.constant 0 : index
    %75 = vector.load %arg2[%c136, %c0_47] : memref<176x8xf32, #tpu.memory_space<vmem>>, vector<2x4xf32>
    %cst_48 = arith.constant dense<0.000000e+00> : vector<2x256xf32>
    %76 = tpu.matmul %75, %74, %cst_48 {dimension_numbers = #tpu.dot_dimension_numbers<[1], [0], [0], [1], [0, 0, 1, 1], [], []>} : vector<2x4xf32>, vector<4x256xf32>, vector<2x256xf32> -> vector<2x256xf32>
    %77 = arith.addf %73, %76 : vector<2x256xf32>
    %c222_i32_49 = arith.constant 222 : i32
    %78 = tpu.dynamic_rotate %47 by %c222_i32_49 dim 1 : vector<4x256xf32>, i32 -> vector<4x256xf32>
    %c144 = arith.constant 144 : index
    %c0_50 = arith.constant 0 : index
    %79 = vector.load %arg2[%c144, %c0_50] : memref<176x8xf32, #tpu.memory_space<vmem>>, vector<2x4xf32>
    %cst_51 = arith.constant dense<0.000000e+00> : vector<2x256xf32>
    %80 = tpu.matmul %79, %78, %cst_51 {dimension_numbers = #tpu.dot_dimension_numbers<[1], [0], [0], [1], [0, 0, 1, 1], [], []>} : vector<2x4xf32>, vector<4x256xf32>, vector<2x256xf32> -> vector<2x256xf32>
    %81 = arith.addf %77, %80 : vector<2x256xf32>
    %c168 = arith.constant 168 : index
    %c0_52 = arith.constant 0 : index
    %82 = vector.load %arg2[%c168, %c0_52] : memref<176x8xf32, #tpu.memory_space<vmem>>, vector<2x1xf32>
    %83 = vector.broadcast %82 : vector<2x1xf32> to vector<2x256xf32>
    %84 = arith.addf %81, %83 : vector<2x256xf32>
    %cst_53 = arith.constant 0.000000e+00 : f32
    %85 = vector.broadcast %cst_53 : f32 to vector<2x256xf32>
    %86 = arith.maximumf %84, %85 : vector<2x256xf32>
    %87 = vector.extract_strided_slice %86 {offsets = [0, 0], sizes = [1, 256], strides = [1, 1]} : vector<2x256xf32> to vector<1x256xf32>
    %c0_54 = arith.constant 0 : index
    %c0_55 = arith.constant 0 : index
    %88 = vector.load %arg3[%c0_54, %c0_55] : memref<688x64xf32, #tpu.memory_space<vmem>>, vector<256x32xf32>
    %cst_56 = arith.constant dense<0.000000e+00> : vector<1x32xf32>
    %89 = tpu.matmul %87, %88, %cst_56 {dimension_numbers = #tpu.dot_dimension_numbers<[1], [0], [0], [1], [0, 0, 1, 1], [], []>} : vector<1x256xf32>, vector<256x32xf32>, vector<1x32xf32> -> vector<1x32xf32>
    %90 = vector.extract_strided_slice %86 {offsets = [1, 0], sizes = [1, 256], strides = [1, 1]} : vector<2x256xf32> to vector<1x256xf32>
    %c256 = arith.constant 256 : index
    %c0_57 = arith.constant 0 : index
    %91 = vector.load %arg3[%c256, %c0_57] : memref<688x64xf32, #tpu.memory_space<vmem>>, vector<256x32xf32>
    %cst_58 = arith.constant dense<0.000000e+00> : vector<1x32xf32>
    %92 = tpu.matmul %90, %91, %cst_58 {dimension_numbers = #tpu.dot_dimension_numbers<[1], [0], [0], [1], [0, 0, 1, 1], [], []>} : vector<1x256xf32>, vector<256x32xf32>, vector<1x32xf32> -> vector<1x32xf32>
    %93 = arith.addf %89, %92 : vector<1x32xf32>
    %c656 = arith.constant 656 : index
    %c0_59 = arith.constant 0 : index
    %94 = vector.load %arg3[%c656, %c0_59] : memref<688x64xf32, #tpu.memory_space<vmem>>, vector<1x32xf32>
    %95 = arith.addf %93, %94 : vector<1x32xf32>
    %cst_60 = arith.constant 0.000000e+00 : f32
    %96 = vector.broadcast %cst_60 : f32 to vector<1x32xf32>
    %97 = arith.maximumf %95, %96 : vector<1x32xf32>
    %c512 = arith.constant 512 : index
    %c0_61 = arith.constant 0 : index
    %98 = vector.load %arg3[%c512, %c0_61] : memref<688x64xf32, #tpu.memory_space<vmem>>, vector<32x64xf32>
    %cst_62 = arith.constant dense<0.000000e+00> : vector<1x64xf32>
    %99 = tpu.matmul %97, %98, %cst_62 {dimension_numbers = #tpu.dot_dimension_numbers<[1], [0], [0], [1], [0, 0, 1, 1], [], []>} : vector<1x32xf32>, vector<32x64xf32>, vector<1x64xf32> -> vector<1x64xf32>
    %c664 = arith.constant 664 : index
    %c0_63 = arith.constant 0 : index
    %100 = vector.load %arg3[%c664, %c0_63] : memref<688x64xf32, #tpu.memory_space<vmem>>, vector<1x64xf32>
    %101 = arith.addf %99, %100 : vector<1x64xf32>
    %cst_64 = arith.constant 0.000000e+00 : f32
    %102 = vector.broadcast %cst_64 : f32 to vector<1x64xf32>
    %103 = arith.maximumf %101, %102 : vector<1x64xf32>
    %c544 = arith.constant 544 : index
    %c0_65 = arith.constant 0 : index
    %104 = vector.load %arg3[%c544, %c0_65] : memref<688x64xf32, #tpu.memory_space<vmem>>, vector<64x48xf32>
    %cst_66 = arith.constant dense<0.000000e+00> : vector<1x48xf32>
    %105 = tpu.matmul %103, %104, %cst_66 {dimension_numbers = #tpu.dot_dimension_numbers<[1], [0], [0], [1], [0, 0, 1, 1], [], []>} : vector<1x64xf32>, vector<64x48xf32>, vector<1x48xf32> -> vector<1x48xf32>
    %c672 = arith.constant 672 : index
    %c0_67 = arith.constant 0 : index
    %106 = vector.load %arg3[%c672, %c0_67] : memref<688x64xf32, #tpu.memory_space<vmem>>, vector<1x48xf32>
    %107 = arith.addf %105, %106 : vector<1x48xf32>
    %cst_68 = arith.constant 0.000000e+00 : f32
    %108 = vector.broadcast %cst_68 : f32 to vector<1x48xf32>
    %109 = arith.maximumf %107, %108 : vector<1x48xf32>
    %c608 = arith.constant 608 : index
    %c0_69 = arith.constant 0 : index
    %110 = vector.load %arg3[%c608, %c0_69] : memref<688x64xf32, #tpu.memory_space<vmem>>, vector<48x16xf32>
    %cst_70 = arith.constant dense<0.000000e+00> : vector<1x16xf32>
    %111 = tpu.matmul %109, %110, %cst_70 {dimension_numbers = #tpu.dot_dimension_numbers<[1], [0], [0], [1], [0, 0, 1, 1], [], []>} : vector<1x48xf32>, vector<48x16xf32>, vector<1x16xf32> -> vector<1x16xf32>
    %c680 = arith.constant 680 : index
    %c0_71 = arith.constant 0 : index
    %112 = vector.load %arg3[%c680, %c0_71] : memref<688x64xf32, #tpu.memory_space<vmem>>, vector<1x16xf32>
    %113 = arith.addf %111, %112 : vector<1x16xf32>
    %114 = vector.shape_cast %113 : vector<1x16xf32> to vector<1x1x16xf32>
    %c0_72 = arith.constant 0 : index
    %c0_73 = arith.constant 0 : index
    %c0_74 = arith.constant 0 : index
    %115 = vector.load %arg4[%c0_72, %c0_73, %c0_74] : memref<1x1x16xf32, #tpu.memory_space<vmem>>, vector<1x1x16xf32>
    tpu.vector_store %arg4[%c0_72, %c0_73, %c0_74], %114 {strides = array<i32>} : memref<1x1x16xf32, #tpu.memory_space<vmem>>, vector<1x1x16xf32>,
    return
  }
  func.func @transform_0(%arg0: i32) -> (i32, i32, i32) {
    %c0_i32 = arith.constant 0 : i32
    %c0_i32_0 = arith.constant 0 : i32
    %c0_i32_1 = arith.constant 0 : i32
    return %arg0, %c0_i32, %c0_i32_0 : i32, i32, i32
  }
  func.func @transform_1(%arg0: i32) -> (i32, i32) {
    %c0_i32 = arith.constant 0 : i32
    %c0_i32_0 = arith.constant 0 : i32
    %c0_i32_1 = arith.constant 0 : i32
    return %c0_i32, %c0_i32_0 : i32, i32
  }
  func.func @transform_2(%arg0: i32) -> (i32, i32) {
    %c0_i32 = arith.constant 0 : i32
    %c0_i32_0 = arith.constant 0 : i32
    %c0_i32_1 = arith.constant 0 : i32
    return %c0_i32, %c0_i32_0 : i32, i32
  }
  func.func @transform_3(%arg0: i32) -> (i32, i32, i32) {
    %c0_i32 = arith.constant 0 : i32
    %c0_i32_0 = arith.constant 0 : i32
    %c0_i32_1 = arith.constant 0 : i32
    return %arg0, %c0_i32, %c0_i32_0 : i32, i32, i32
  }
}

</mosaic_0001>

<llo_original>
// kernel: tpu_custom_call.1
$region0: #{tpu_custom_call.1}
  #allocation0 [shape = 'u32[]', space=smem, size = 0x4, offset = 0x4, fixed_abs, tag = 'smem constant byte address 0x4 - core index']
  #allocation1 [shape = 'u32[72,128]{1,0:T(1,128)}', space=vmem, size = 0x9000, scoped, tag = 'internal scratch']
  %s0 = inlined_call_operand.vmem [shape: f32[2,4,256], index: 0, kind: input, shape index: {}]
  %s1 = inlined_call_operand.vmem [shape: f32[176,8], index: 1, kind: input, shape index: {}]
  %s2 = inlined_call_operand.vmem [shape: f32[688,64], index: 2, kind: input, shape index: {}]
  %s3 = inlined_call_operand.hbm [shape: f32[2,1,16], index: 3, kind: output, shape index: {}]
  %s4 = sld [smem:[#allocation0]]
  $region45: #{tpu_custom_call.1} parent=0
    _
  %s6 = ssub.s32 1, %s4
  %s7 = scalar_select 0, %s6, %s4
  $region1: #{tpu_custom_call.1} parent=0
    #allocation2 [shape = 'u8[1024]{0}', space=vmem, size = 0x400, scoped, tag = 'output window, operand 0']
    #allocation3 [shape = 's32[2]{0}', space=sflag, size = 0x8, scoped, tag = 'scoped memory for tpu_custom_call.1']
    %8 = vsyncpa [#allocation3], 0
    %s9 = scalar_lea.sflag [#allocation3], 1
    %10 = vsyncpa %s9, 0
    loop: start=0, step=1, limit=4
    $region2: #{tpu_custom_call.1} parent=1 // loop_pre_header
      _
    $region3: #{tpu_custom_call.1} parent=1 // loop_header
      %s12 = sphi 0, %s16
      %p13 = scmp.ge.s32.totalorder %s12, 4
      %s22 = sphi 0, %s24
      %s25 = sphi 0, %s22
      %s26 = sphi 0, %s25
      %s42 = sphi 0, %s26
      %s46 = sphi 0, %s46
      %s48 = sphi 0, %s46
      %s49 = sphi 0, %s48
      %s63 = sphi 0, %s49
      %s67 = sphi 0, %s67
      %s69 = sphi 0, %s67
      %s70 = sphi 0, %s69
      %s84 = sphi 0, %s70
      %s90 = sphi 0, %s92
      %s93 = sphi 0, %s90
      %s94 = sphi 0, %s93
      %s110 = sphi 0, %s94
    $region4: #{tpu_custom_call.1} parent=1 // loop_header_branch
      %15 = sbr.rel (%p13) target = $region8
    $region5: #{tpu_custom_call.1} parent=1 // loop_body
      %s17 = ssub.s32 %s12, 1
      %s18 = ssub.s32 %s12, 2
      %s19 = sadd.s32 %s12, 1
      %s20 = ssub.s32 %s12, %s19
      %p21 = scmp.eq.s32.totalorder %s20, 0
      %s23 = sadd.s32 %s22, 1
      %s24 = scalar_select %p21, %s22, %s23
      %p27 = pneg %p21
      %p28 = scmp.eq.s32.totalorder %s12, 1
      %p29 = por %p27, %p28
      %p30 = scmp.ne.s32.totalorder %s22, %s25
      %p31 = scmp.eq.s32.totalorder %s12, 0
      %p32 = por %p30, %p31
      %p33 = scmp.ne.s32.totalorder %s22, %s25
      %p34 = scmp.eq.s32.totalorder %s17, 1
      %p35 = por %p33, %p34
      %p36 = scmp.ne.s32.totalorder %s25, %s26
      %p37 = scmp.eq.s32.totalorder %s17, 0
      %p38 = por %p36, %p37
      %p39 = scmp.ne.s32.totalorder %s25, %s26
      %p40 = scmp.eq.s32.totalorder %s18, 1
      %p41 = por %p39, %p40
      %p43 = scmp.ne.s32.totalorder %s26, %s42
      %p44 = scmp.eq.s32.totalorder %s18, 0
      %p45 = por %p43, %p44
      %s47 = sadd.s32 %s46, 1
      %p50 = scmp.eq.s32.totalorder %s12, 1
      %p51 = scmp.ne.s32.totalorder %s46, %s48
      %p52 = scmp.eq.s32.totalorder %s12, 0
      %p53 = por %p51, %p52
      %p54 = scmp.ne.s32.totalorder %s46, %s48
      %p55 = scmp.eq.s32.totalorder %s17, 1
      %p56 = por %p54, %p55
      %p57 = scmp.ne.s32.totalorder %s48, %s49
      %p58 = scmp.eq.s32.totalorder %s17, 0
      %p59 = por %p57, %p58
      %p60 = scmp.ne.s32.totalorder %s48, %s49
      %p61 = scmp.eq.s32.totalorder %s18, 1
      %p62 = por %p60, %p61
      %p64 = scmp.ne.s32.totalorder %s49, %s63
      %p65 = scmp.eq.s32.totalorder %s18, 0
      %p66 = por %p64, %p65
      %s68 = sadd.s32 %s67, 1
      %p71 = scmp.eq.s32.totalorder %s12, 1
      %p72 = scmp.ne.s32.totalorder %s67, %s69
      %p73 = scmp.eq.s32.totalorder %s12, 0
      %p74 = por %p72, %p73
      %p75 = scmp.ne.s32.totalorder %s67, %s69
      %p76 = scmp.eq.s32.totalorder %s17, 1
      %p77 = por %p75, %p76
      %p78 = scmp.ne.s32.totalorder %s69, %s70
      %p79 = scmp.eq.s32.totalorder %s17, 0
      %p80 = por %p78, %p79
      %p81 = scmp.ne.s32.totalorder %s69, %s70
      %p82 = scmp.eq.s32.totalorder %s18, 1
      %p83 = por %p81, %p82
      %p85 = scmp.ne.s32.totalorder %s70, %s84
      %p86 = scmp.eq.s32.totalorder %s18, 0
      %p87 = por %p85, %p86
      %s88 = ssub.s32 %s12, %s19
      %p89 = scmp.eq.s32.totalorder %s88, 0
      %s91 = sadd.s32 %s90, 1
      %s92 = scalar_select %p89, %s90, %s91
      %p95 = pneg %p89
      %p96 = scmp.eq.s32.totalorder %s12, 1
      %p97 = por %p95, %p96
      %p98 = scmp.ne.s32.totalorder %s90, %s93
      %p99 = scmp.eq.s32.totalorder %s12, 0
      %p100 = por %p98, %p99
      %p101 = scmp.ne.s32.totalorder %s90, %s93
      %p102 = scmp.eq.s32.totalorder %s17, 1
      %p103 = por %p101, %p102
      %p104 = scmp.ne.s32.totalorder %s93, %s94
      %p105 = scmp.eq.s32.totalorder %s17, 0
      %p106 = por %p104, %p105
      %p107 = scmp.ne.s32.totalorder %s93, %s94
      %p108 = scmp.eq.s32.totalorder %s18, 1
      %p109 = por %p107, %p108
      %p111 = scmp.ne.s32.totalorder %s94, %s110
      %p112 = scmp.eq.s32.totalorder %s18, 0
      %p113 = por %p111, %p112
      %p114 = scmp.le.s32.totalorder 1, %s12
      %p115 = scmp.lt.s32.totalorder %s12, 3
      %p116 = pnand %p114, %p115
      %p117 = pneg %p116
      // Predicated region
      $region9: #{tpu_custom_call.1} parent=5 // pred_check
        _
      $region10: #{tpu_custom_call.1} parent=5 // pred_check_branch
        %119 = sbr.rel (%p116) target = $region12
      $region11: #{tpu_custom_call.1} parent=5 // pred_region
        %s120 = ssub.s32 %s12, 1
        // Predicated region
        $region13: #{tpu_custom_call.1} parent=11 // pred_check
          %p121 = pneg %p59
        $region14: #{tpu_custom_call.1} parent=11 // pred_check_branch
          %123 = sbr.rel (%p121) target = $region16
        $region15: #{tpu_custom_call.1} parent=11 // pred_region
          _
        $region16: #{tpu_custom_call.1} parent=11 // pred_fallthru
          _
        // Predicated region
        $region17: #{tpu_custom_call.1} parent=11 // pred_check
          %p124 = pneg %p80
        $region18: #{tpu_custom_call.1} parent=11 // pred_check_branch
          %126 = sbr.rel (%p124) target = $region20
        $region19: #{tpu_custom_call.1} parent=11 // pred_region
          _
        $region20: #{tpu_custom_call.1} parent=11 // pred_fallthru
          _
      $region12: #{tpu_custom_call.1} parent=5 // pred_fallthru
        _
      %p127 = scmp.lt.s32.totalorder %s12, 2
      // Predicated region
      $region21: #{tpu_custom_call.1} parent=5 // pred_check
        %p128 = pneg %p127
      $region22: #{tpu_custom_call.1} parent=5 // pred_check_branch
        %130 = sbr.rel (%p128) target = $region24
      $region23: #{tpu_custom_call.1} parent=5 // pred_region
        // Predicated region
        $region25: #{tpu_custom_call.1} parent=23 // pred_check
          %p131 = pneg %p32
        $region26: #{tpu_custom_call.1} parent=23 // pred_check_branch
          %133 = sbr.rel (%p131) target = $region28
        $region27: #{tpu_custom_call.1} parent=23 // pred_region
          %p134 = scmp.lt.s32.totalorder %s12, 1
          %s135 = scalar_select %p134, %s12, 1
          %s136 = smul.addr %s135, 2
          %s137 = smul.addr %s136, 4
          %s138 = scalar_lea.vmem %s0, %s137
        $region28: #{tpu_custom_call.1} parent=23 // pred_fallthru
          _
      $region24: #{tpu_custom_call.1} parent=5 // pred_fallthru
        _
      %p139 = scmp.le.s32.totalorder 1, %s12
      %p140 = scmp.lt.s32.totalorder %s12, 3
      %p141 = pnand %p139, %p140
      %p142 = pneg %p141
      // Predicated region
      $region29: #{tpu_custom_call.1} parent=5 // pred_check
        _
      $region30: #{tpu_custom_call.1} parent=5 // pred_check_branch
        %144 = sbr.rel (%p141) target = $region32
      $region31: #{tpu_custom_call.1} parent=5 // pred_region
        %s145 = ssub.s32 %s12, 1
        %p146 = scmp.lt.s32.totalorder %s17, 1
        %s147 = scalar_select %p146, %s17, 1
        %s148 = smul.addr %s147, 2
        %s149 = smul.addr %s148, 4
        %s150 = scalar_lea.vmem %s0, %s149
        %p151 = pneg %p38
        %p152 = pneg %p35
        %p153 = pneg %p59
        %p154 = pneg %p56
        %p155 = pneg %p80
        %p156 = pneg %p77
        %p157 = pneg %p106
        %p158 = pneg %p103
        %s159 = sand.u32 %s93, 1
        %s160 = scalar_lea.sflag [#allocation3], %s159
        %s161 = sand.u32 %s93, 1
        %s162 = scalar_lea.vmem [#allocation2], %s161
        %p163 = scmp.lt.s32.totalorder %s17, 1
        %s164 = scalar_select %p163, %s17, 1
        %s165 = smul.addr %s164, 2
        %s166 = smul.addr %s165, 4
        %s167 = scalar_lea.vmem %s0, %s166
        %v168 = vld [vmem:[%s167] sm:$0xff]
        %v169 = vld [vmem:[%s1] sm:$0xff]
        %v170 = vld [vmem:[%s1 + $0x98] sm:$0xff]
        %172 = vset.pattern.permute.xlu0 0
        %173 = vperm.xlu0 %172, %v170
        %v174 = vpop.permute.xlu0 %173
        %177 = vst [vmem:[#allocation1] ss:$2 sm:$0xff] %v168
        %v178 = vld.sshfl [vmem:[#allocation1] sm:$0xff pattern:$0x75316420]
        %v179 = vld.sshfl [vmem:[#allocation1 + $0x8] sm:$0xff pattern:$0x75316420]
        %vm180 = vcmask 31744
        %v182 = vsel %vm180, %v169, 0
        %vm184 = vcmask 1043456
        %v185 = vsel %vm184, %v178, 0
        %v187 = vsel %vm184, %v179, 0
        %189 = vmatpush.msra.mxu0 0.0
        %190 = vmatpush.msra.mxu0 0.0
        %191 = vmatpush.msra.mxu0 0.0
        %192 = vmatpush.msra.mxu0 0.0
        %193 = vmatpush.msra.mxu0 0.0
        %194 = vmatpush.msra.mxu0 0.0
        %195 = vmatpush.msra.mxu0 0.0
        %196 = vmatpush.msra.mxu0 0.0
        %197 = vmatpush.msra.mxu0 0.0
        %198 = vmatpush.msra.mxu0 0.0
        %199 = vmatpush.msra.mxu0 0.0
        %200 = vmatpush.msra.mxu0 0.0
        %201 = vmatpush.msra.mxu0 0.0
        %202 = vmatpush.msra.mxu0 0.0
        %203 = vmatpush.msra.mxu0 0.0
        %204 = vmatpush.msra.mxu0 %v185
        %205 = vmatmul.f32.gmra.mxu0 %v182
        %v206 = vpop.f32.mrf.mxu0
        %v207 = vadd.f32 %v174, %v206
        %208 = vdwg.mxu0
        %209 = vmatpush.msra.mxu0 0.0
        %210 = vmatpush.msra.mxu0 0.0
        %211 = vmatpush.msra.mxu0 0.0
        %212 = vmatpush.msra.mxu0 0.0
        %213 = vmatpush.msra.mxu0 0.0
        %214 = vmatpush.msra.mxu0 0.0
        %215 = vmatpush.msra.mxu0 0.0
        %216 = vmatpush.msra.mxu0 0.0
        %217 = vmatpush.msra.mxu0 0.0
        %218 = vmatpush.msra.mxu0 0.0
        %219 = vmatpush.msra.mxu0 0.0
        %220 = vmatpush.msra.mxu0 0.0
        %221 = vmatpush.msra.mxu0 0.0
        %222 = vmatpush.msra.mxu0 0.0
        %223 = vmatpush.msra.mxu0 0.0
        %224 = vmatpush.msra.mxu0 %v187
        %225 = vmatmul.f32.gmra.mxu0 %v182
        %v226 = vpop.f32.mrf.mxu0
        %v227 = vadd.f32 %v174, %v226
        %228 = vdwg.mxu0
        %v229 = vmax.f32 %v207, 0.0
        %v230 = vmax.f32 %v227, 0.0
        %v231 = vld [vmem:[%s1 + $0x8] sm:$0xf]
        %232 = vrot.lane.b32.xlu0 %v229, 127
        %v233 = vpop.permute.xlu0 %232
        %234 = vrot.lane.b32.xlu0 %v230, 127
        %v235 = vpop.permute.xlu0 %234
        %v236 = vlaneseq
        %v237 = vand.u32 %v236, 127
        %vm238 = vcmp.lt.s32.totalorder %v237, 127
        %v239 = vsel %vm238, %v233, %v235
        %v240 = vsel %vm238, %v235, %v233
        %v241 = vld [vmem:[%s1 + $0x10] sm:$0xf]
        %vm242 = vcmask 64512
        %v244 = vsel %vm242, %v241, 0
        %246 = vmatpush.msra.mxu0 0.0
        %247 = vmatpush.msra.mxu0 0.0
        %248 = vmatpush.msra.mxu0 0.0
        %249 = vmatpush.msra.mxu0 0.0
        %250 = vmatpush.msra.mxu0 0.0
        %251 = vmatpush.msra.mxu0 0.0
        %252 = vmatpush.msra.mxu0 0.0
        %253 = vmatpush.msra.mxu0 0.0
        %254 = vmatpush.msra.mxu0 0.0
        %255 = vmatpush.msra.mxu0 0.0
        %256 = vmatpush.msra.mxu0 0.0
        %257 = vmatpush.msra.mxu0 0.0
        %258 = vmatpush.msra.mxu0 0.0
        %259 = vmatpush.msra.mxu0 0.0
        %260 = vmatpush.msra.mxu0 0.0
        %261 = vmatpush.msra.mxu0 %v239
        %262 = vmatmul.f32.gmra.mxu0 %v244
        %v263 = vpop.f32.mrf.mxu0
        %v264 = vadd.f32 0.0, %v263
        %265 = vdwg.mxu0
        %266 = vmatpush.msra.mxu0 0.0
        %267 = vmatpush.msra.mxu0 0.0
        %268 = vmatpush.msra.mxu0 0.0
        %269 = vmatpush.msra.mxu0 0.0
        %270 = vmatpush.msra.mxu0 0.0
        %271 = vmatpush.msra.mxu0 0.0
        %272 = vmatpush.msra.mxu0 0.0
        %273 = vmatpush.msra.mxu0 0.0
        %274 = vmatpush.msra.mxu0 0.0
        %275 = vmatpush.msra.mxu0 0.0
        %276 = vmatpush.msra.mxu0 0.0
        %277 = vmatpush.msra.mxu0 0.0
        %278 = vmatpush.msra.mxu0 0.0
        %279 = vmatpush.msra.mxu0 0.0
        %280 = vmatpush.msra.mxu0 0.0
        %281 = vmatpush.msra.mxu0 %v240
        %282 = vmatmul.f32.gmra.mxu0 %v244
        %v283 = vpop.f32.mrf.mxu0
        %v284 = vadd.f32 0.0, %v283
        %285 = vdwg.mxu0
        %v287 = vsel %vm242, %v231, 0
        %289 = vmatpush.msra.mxu0 0.0
        %290 = vmatpush.msra.mxu0 0.0
        %291 = vmatpush.msra.mxu0 0.0
        %292 = vmatpush.msra.mxu0 0.0
        %293 = vmatpush.msra.mxu0 0.0
        %294 = vmatpush.msra.mxu0 0.0
        %295 = vmatpush.msra.mxu0 0.0
        %296 = vmatpush.msra.mxu0 0.0
        %297 = vmatpush.msra.mxu0 0.0
        %298 = vmatpush.msra.mxu0 0.0
        %299 = vmatpush.msra.mxu0 0.0
        %300 = vmatpush.msra.mxu0 0.0
        %301 = vmatpush.msra.mxu0 0.0
        %302 = vmatpush.msra.mxu0 0.0
        %303 = vmatpush.msra.mxu0 0.0
        %304 = vmatpush.msra.mxu0 %v229
        %305 = vmatmul.f32.gmra.mxu0 %v287
        %v306 = vpop.f32.mrf.mxu0
        %v307 = vadd.f32 %v264, %v306
        %308 = vdwg.mxu0
        %309 = vmatpush.msra.mxu0 0.0
        %310 = vmatpush.msra.mxu0 0.0
        %311 = vmatpush.msra.mxu0 0.0
        %312 = vmatpush.msra.mxu0 0.0
        %313 = vmatpush.msra.mxu0 0.0
        %314 = vmatpush.msra.mxu0 0.0
        %315 = vmatpush.msra.mxu0 0.0
        %316 = vmatpush.msra.mxu0 0.0
        %317 = vmatpush.msra.mxu0 0.0
        %318 = vmatpush.msra.mxu0 0.0
        %319 = vmatpush.msra.mxu0 0.0
        %320 = vmatpush.msra.mxu0 0.0
        %321 = vmatpush.msra.mxu0 0.0
        %322 = vmatpush.msra.mxu0 0.0
        %323 = vmatpush.msra.mxu0 0.0
        %324 = vmatpush.msra.mxu0 %v230
        %325 = vmatmul.f32.gmra.mxu0 %v287
        %v326 = vpop.f32.mrf.mxu0
        %v327 = vadd.f32 %v284, %v326
        %328 = vdwg.mxu0
        %329 = vrot.lane.b32.xlu0 %v229, 126
        %v330 = vpop.permute.xlu0 %329
        %331 = vrot.lane.b32.xlu0 %v230, 126
        %v332 = vpop.permute.xlu0 %331
        %vm333 = vcmp.lt.s32.totalorder %v237, 126
        %v334 = vsel %vm333, %v330, %v332
        %v335 = vsel %vm333, %v332, %v330
        %v336 = vld [vmem:[%s1 + $0x18] sm:$0xf]
        %v338 = vsel %vm242, %v336, 0
        %340 = vmatpush.msra.mxu0 0.0
        %341 = vmatpush.msra.mxu0 0.0
        %342 = vmatpush.msra.mxu0 0.0
        %343 = vmatpush.msra.mxu0 0.0
        %344 = vmatpush.msra.mxu0 0.0
        %345 = vmatpush.msra.mxu0 0.0
        %346 = vmatpush.msra.mxu0 0.0
        %347 = vmatpush.msra.mxu0 0.0
        %348 = vmatpush.msra.mxu0 0.0
        %349 = vmatpush.msra.mxu0 0.0
        %350 = vmatpush.msra.mxu0 0.0
        %351 = vmatpush.msra.mxu0 0.0
        %352 = vmatpush.msra.mxu0 0.0
        %353 = vmatpush.msra.mxu0 0.0
        %354 = vmatpush.msra.mxu0 0.0
        %355 = vmatpush.msra.mxu0 %v334
        %356 = vmatmul.f32.gmra.mxu0 %v338
        %v357 = vpop.f32.mrf.mxu0
        %v358 = vadd.f32 0.0, %v357
        %359 = vdwg.mxu0
        %360 = vmatpush.msra.mxu0 0.0
        %361 = vmatpush.msra.mxu0 0.0
        %362 = vmatpush.msra.mxu0 0.0
        %363 = vmatpush.msra.mxu0 0.0
        %364 = vmatpush.msra.mxu0 0.0
        %365 = vmatpush.msra.mxu0 0.0
        %366 = vmatpush.msra.mxu0 0.0
        %367 = vmatpush.msra.mxu0 0.0
        %368 = vmatpush.msra.mxu0 0.0
        %369 = vmatpush.msra.mxu0 0.0
        %370 = vmatpush.msra.mxu0 0.0
        %371 = vmatpush.msra.mxu0 0.0
        %372 = vmatpush.msra.mxu0 0.0
        %373 = vmatpush.msra.mxu0 0.0
        %374 = vmatpush.msra.mxu0 0.0
        %375 = vmatpush.msra.mxu0 %v335
        %376 = vmatmul.f32.gmra.mxu0 %v338
        %v377 = vpop.f32.mrf.mxu0
        %v378 = vadd.f32 0.0, %v377
        %379 = vdwg.mxu0
        %v380 = vadd.f32 %v307, %v358
        %v381 = vadd.f32 %v327, %v378
        %382 = vrot.lane.b32.xlu0 %v229, 112
        %v383 = vpop.permute.xlu0 %382
        %384 = vrot.lane.b32.xlu0 %v230, 112
        %v385 = vpop.permute.xlu0 %384
        %vm386 = vcmp.lt.s32.totalorder %v237, 112
        %v387 = vsel %vm386, %v383, %v385
        %v388 = vsel %vm386, %v385, %v383
        %v389 = vld [vmem:[%s1 + $0x20] sm:$0xf]
        %v391 = vsel %vm242, %v389, 0
        %393 = vmatpush.msra.mxu0 0.0
        %394 = vmatpush.msra.mxu0 0.0
        %395 = vmatpush.msra.mxu0 0.0
        %396 = vmatpush.msra.mxu0 0.0
        %397 = vmatpush.msra.mxu0 0.0
        %398 = vmatpush.msra.mxu0 0.0
        %399 = vmatpush.msra.mxu0 0.0
        %400 = vmatpush.msra.mxu0 0.0
        %401 = vmatpush.msra.mxu0 0.0
        %402 = vmatpush.msra.mxu0 0.0
        %403 = vmatpush.msra.mxu0 0.0
        %404 = vmatpush.msra.mxu0 0.0
        %405 = vmatpush.msra.mxu0 0.0
        %406 = vmatpush.msra.mxu0 0.0
        %407 = vmatpush.msra.mxu0 0.0
        %408 = vmatpush.msra.mxu0 %v387
        %409 = vmatmul.f32.gmra.mxu0 %v391
        %v410 = vpop.f32.mrf.mxu0
        %v411 = vadd.f32 0.0, %v410
        %412 = vdwg.mxu0
        %413 = vmatpush.msra.mxu0 0.0
        %414 = vmatpush.msra.mxu0 0.0
        %415 = vmatpush.msra.mxu0 0.0
        %416 = vmatpush.msra.mxu0 0.0
        %417 = vmatpush.msra.mxu0 0.0
        %418 = vmatpush.msra.mxu0 0.0
        %419 = vmatpush.msra.mxu0 0.0
        %420 = vmatpush.msra.mxu0 0.0
        %421 = vmatpush.msra.mxu0 0.0
        %422 = vmatpush.msra.mxu0 0.0
        %423 = vmatpush.msra.mxu0 0.0
        %424 = vmatpush.msra.mxu0 0.0
        %425 = vmatpush.msra.mxu0 0.0
        %426 = vmatpush.msra.mxu0 0.0
        %427 = vmatpush.msra.mxu0 0.0
        %428 = vmatpush.msra.mxu0 %v388
        %429 = vmatmul.f32.gmra.mxu0 %v391
        %v430 = vpop.f32.mrf.mxu0
        %v431 = vadd.f32 0.0, %v430
        %432 = vdwg.mxu0
        %v433 = vadd.f32 %v380, %v411
        %v434 = vadd.f32 %v381, %v431
        %435 = vrot.lane.b32.xlu0 %v229, 111
        %v436 = vpop.permute.xlu0 %435
        %437 = vrot.lane.b32.xlu0 %v230, 111
        %v438 = vpop.permute.xlu0 %437
        %vm439 = vcmp.lt.s32.totalorder %v237, 111
        %v440 = vsel %vm439, %v436, %v438
        %v441 = vsel %vm439, %v438, %v436
        %v442 = vld [vmem:[%s1 + $0x28] sm:$0xf]
        %v444 = vsel %vm242, %v442, 0
        %446 = vmatpush.msra.mxu0 0.0
        %447 = vmatpush.msra.mxu0 0.0
        %448 = vmatpush.msra.mxu0 0.0
        %449 = vmatpush.msra.mxu0 0.0
        %450 = vmatpush.msra.mxu0 0.0
        %451 = vmatpush.msra.mxu0 0.0
        %452 = vmatpush.msra.mxu0 0.0
        %453 = vmatpush.msra.mxu0 0.0
        %454 = vmatpush.msra.mxu0 0.0
        %455 = vmatpush.msra.mxu0 0.0
        %456 = vmatpush.msra.mxu0 0.0
        %457 = vmatpush.msra.mxu0 0.0
        %458 = vmatpush.msra.mxu0 0.0
        %459 = vmatpush.msra.mxu0 0.0
        %460 = vmatpush.msra.mxu0 0.0
        %461 = vmatpush.msra.mxu0 %v440
        %462 = vmatmul.f32.gmra.mxu0 %v444
        %v463 = vpop.f32.mrf.mxu0
        %v464 = vadd.f32 0.0, %v463
        %465 = vdwg.mxu0
        %466 = vmatpush.msra.mxu0 0.0
        %467 = vmatpush.msra.mxu0 0.0
        %468 = vmatpush.msra.mxu0 0.0
        %469 = vmatpush.msra.mxu0 0.0
        %470 = vmatpush.msra.mxu0 0.0
        %471 = vmatpush.msra.mxu0 0.0
        %472 = vmatpush.msra.mxu0 0.0
        %473 = vmatpush.msra.mxu0 0.0
        %474 = vmatpush.msra.mxu0 0.0
        %475 = vmatpush.msra.mxu0 0.0
        %476 = vmatpush.msra.mxu0 0.0
        %477 = vmatpush.msra.mxu0 0.0
        %478 = vmatpush.msra.mxu0 0.0
        %479 = vmatpush.msra.mxu0 0.0
        %480 = vmatpush.msra.mxu0 0.0
        %481 = vmatpush.msra.mxu0 %v441
        %482 = vmatmul.f32.gmra.mxu0 %v444
        %v483 = vpop.f32.mrf.mxu0
        %v484 = vadd.f32 0.0, %v483
        %485 = vdwg.mxu0
        %v486 = vadd.f32 %v433, %v464
        %v487 = vadd.f32 %v434, %v484
        %488 = vrot.lane.b32.xlu0 %v229, 110
        %v489 = vpop.permute.xlu0 %488
        %490 = vrot.lane.b32.xlu0 %v230, 110
        %v491 = vpop.permute.xlu0 %490
        %vm492 = vcmp.lt.s32.totalorder %v237, 110
        %v493 = vsel %vm492, %v489, %v491
        %v494 = vsel %vm492, %v491, %v489
        %v495 = vld [vmem:[%s1 + $0x30] sm:$0xf]
        %v497 = vsel %vm242, %v495, 0
        %499 = vmatpush.msra.mxu0 0.0
        %500 = vmatpush.msra.mxu0 0.0
        %501 = vmatpush.msra.mxu0 0.0
        %502 = vmatpush.msra.mxu0 0.0
        %503 = vmatpush.msra.mxu0 0.0
        %504 = vmatpush.msra.mxu0 0.0
        %505 = vmatpush.msra.mxu0 0.0
        %506 = vmatpush.msra.mxu0 0.0
        %507 = vmatpush.msra.mxu0 0.0
        %508 = vmatpush.msra.mxu0 0.0
        %509 = vmatpush.msra.mxu0 0.0
        %510 = vmatpush.msra.mxu0 0.0
        %511 = vmatpush.msra.mxu0 0.0
        %512 = vmatpush.msra.mxu0 0.0
        %513 = vmatpush.msra.mxu0 0.0
        %514 = vmatpush.msra.mxu0 %v493
        %515 = vmatmul.f32.gmra.mxu0 %v497
        %v516 = vpop.f32.mrf.mxu0
        %v517 = vadd.f32 0.0, %v516
        %518 = vdwg.mxu0
        %519 = vmatpush.msra.mxu0 0.0
        %520 = vmatpush.msra.mxu0 0.0
        %521 = vmatpush.msra.mxu0 0.0
        %522 = vmatpush.msra.mxu0 0.0
        %523 = vmatpush.msra.mxu0 0.0
        %524 = vmatpush.msra.mxu0 0.0
        %525 = vmatpush.msra.mxu0 0.0
        %526 = vmatpush.msra.mxu0 0.0
        %527 = vmatpush.msra.mxu0 0.0
        %528 = vmatpush.msra.mxu0 0.0
        %529 = vmatpush.msra.mxu0 0.0
        %530 = vmatpush.msra.mxu0 0.0
        %531 = vmatpush.msra.mxu0 0.0
        %532 = vmatpush.msra.mxu0 0.0
        %533 = vmatpush.msra.mxu0 0.0
        %534 = vmatpush.msra.mxu0 %v494
        %535 = vmatmul.f32.gmra.mxu0 %v497
        %v536 = vpop.f32.mrf.mxu0
        %v537 = vadd.f32 0.0, %v536
        %538 = vdwg.mxu0
        %v539 = vadd.f32 %v486, %v517
        %v540 = vadd.f32 %v487, %v537
        %541 = vrot.lane.b32.xlu0 %v229, 96
        %v542 = vpop.permute.xlu0 %541
        %543 = vrot.lane.b32.xlu0 %v230, 96
        %v544 = vpop.permute.xlu0 %543
        %vm545 = vcmp.lt.s32.totalorder %v237, 96
        %v546 = vsel %vm545, %v542, %v544
        %v547 = vsel %vm545, %v544, %v542
        %v548 = vld [vmem:[%s1 + $0x38] sm:$0xf]
        %v550 = vsel %vm242, %v548, 0
        %552 = vmatpush.msra.mxu0 0.0
        %553 = vmatpush.msra.mxu0 0.0
        %554 = vmatpush.msra.mxu0 0.0
        %555 = vmatpush.msra.mxu0 0.0
        %556 = vmatpush.msra.mxu0 0.0
        %557 = vmatpush.msra.mxu0 0.0
        %558 = vmatpush.msra.mxu0 0.0
        %559 = vmatpush.msra.mxu0 0.0
        %560 = vmatpush.msra.mxu0 0.0
        %561 = vmatpush.msra.mxu0 0.0
        %562 = vmatpush.msra.mxu0 0.0
        %563 = vmatpush.msra.mxu0 0.0
        %564 = vmatpush.msra.mxu0 0.0
        %565 = vmatpush.msra.mxu0 0.0
        %566 = vmatpush.msra.mxu0 0.0
        %567 = vmatpush.msra.mxu0 %v546
        %568 = vmatmul.f32.gmra.mxu0 %v550
        %v569 = vpop.f32.mrf.mxu0
        %v570 = vadd.f32 0.0, %v569
        %571 = vdwg.mxu0
        %572 = vmatpush.msra.mxu0 0.0
        %573 = vmatpush.msra.mxu0 0.0
        %574 = vmatpush.msra.mxu0 0.0
        %575 = vmatpush.msra.mxu0 0.0
        %576 = vmatpush.msra.mxu0 0.0
        %577 = vmatpush.msra.mxu0 0.0
        %578 = vmatpush.msra.mxu0 0.0
        %579 = vmatpush.msra.mxu0 0.0
        %580 = vmatpush.msra.mxu0 0.0
        %581 = vmatpush.msra.mxu0 0.0
        %582 = vmatpush.msra.mxu0 0.0
        %583 = vmatpush.msra.mxu0 0.0
        %584 = vmatpush.msra.mxu0 0.0
        %585 = vmatpush.msra.mxu0 0.0
        %586 = vmatpush.msra.mxu0 0.0
        %587 = vmatpush.msra.mxu0 %v547
        %588 = vmatmul.f32.gmra.mxu0 %v550
        %v589 = vpop.f32.mrf.mxu0
        %v590 = vadd.f32 0.0, %v589
        %591 = vdwg.mxu0
        %v592 = vadd.f32 %v539, %v570
        %v593 = vadd.f32 %v540, %v590
        %594 = vrot.lane.b32.xlu0 %v229, 95
        %v595 = vpop.permute.xlu0 %594
        %596 = vrot.lane.b32.xlu0 %v230, 95
        %v597 = vpop.permute.xlu0 %596
        %vm598 = vcmp.lt.s32.totalorder %v237, 95
        %v599 = vsel %vm598, %v595, %v597
        %v600 = vsel %vm598, %v597, %v595
        %v601 = vld [vmem:[%s1 + $0x40] sm:$0xf]
        %v603 = vsel %vm242, %v601, 0
        %605 = vmatpush.msra.mxu0 0.0
        %606 = vmatpush.msra.mxu0 0.0
        %607 = vmatpush.msra.mxu0 0.0
        %608 = vmatpush.msra.mxu0 0.0
        %609 = vmatpush.msra.mxu0 0.0
        %610 = vmatpush.msra.mxu0 0.0
        %611 = vmatpush.msra.mxu0 0.0
        %612 = vmatpush.msra.mxu0 0.0
        %613 = vmatpush.msra.mxu0 0.0
        %614 = vmatpush.msra.mxu0 0.0
        %615 = vmatpush.msra.mxu0 0.0
        %616 = vmatpush.msra.mxu0 0.0
        %617 = vmatpush.msra.mxu0 0.0
        %618 = vmatpush.msra.mxu0 0.0
        %619 = vmatpush.msra.mxu0 0.0
        %620 = vmatpush.msra.mxu0 %v599
        %621 = vmatmul.f32.gmra.mxu0 %v603
        %v622 = vpop.f32.mrf.mxu0
        %v623 = vadd.f32 0.0, %v622
        %624 = vdwg.mxu0
        %625 = vmatpush.msra.mxu0 0.0
        %626 = vmatpush.msra.mxu0 0.0
        %627 = vmatpush.msra.mxu0 0.0
        %628 = vmatpush.msra.mxu0 0.0
        %629 = vmatpush.msra.mxu0 0.0
        %630 = vmatpush.msra.mxu0 0.0
        %631 = vmatpush.msra.mxu0 0.0
        %632 = vmatpush.msra.mxu0 0.0
        %633 = vmatpush.msra.mxu0 0.0
        %634 = vmatpush.msra.mxu0 0.0
        %635 = vmatpush.msra.mxu0 0.0
        %636 = vmatpush.msra.mxu0 0.0
        %637 = vmatpush.msra.mxu0 0.0
        %638 = vmatpush.msra.mxu0 0.0
        %639 = vmatpush.msra.mxu0 0.0
        %640 = vmatpush.msra.mxu0 %v600
        %641 = vmatmul.f32.gmra.mxu0 %v603
        %v642 = vpop.f32.mrf.mxu0
        %v643 = vadd.f32 0.0, %v642
        %644 = vdwg.mxu0
        %v645 = vadd.f32 %v592, %v623
        %v646 = vadd.f32 %v593, %v643
        %647 = vrot.lane.b32.xlu0 %v229, 94
        %v648 = vpop.permute.xlu0 %647
        %649 = vrot.lane.b32.xlu0 %v230, 94
        %v650 = vpop.permute.xlu0 %649
        %vm651 = vcmp.lt.s32.totalorder %v237, 94
        %v652 = vsel %vm651, %v648, %v650
        %v653 = vsel %vm651, %v650, %v648
        %v654 = vld [vmem:[%s1 + $0x48] sm:$0xf]
        %v656 = vsel %vm242, %v654, 0
        %658 = vmatpush.msra.mxu0 0.0
        %659 = vmatpush.msra.mxu0 0.0
        %660 = vmatpush.msra.mxu0 0.0
        %661 = vmatpush.msra.mxu0 0.0
        %662 = vmatpush.msra.mxu0 0.0
        %663 = vmatpush.msra.mxu0 0.0
        %664 = vmatpush.msra.mxu0 0.0
        %665 = vmatpush.msra.mxu0 0.0
        %666 = vmatpush.msra.mxu0 0.0
        %667 = vmatpush.msra.mxu0 0.0
        %668 = vmatpush.msra.mxu0 0.0
        %669 = vmatpush.msra.mxu0 0.0
        %670 = vmatpush.msra.mxu0 0.0
        %671 = vmatpush.msra.mxu0 0.0
        %672 = vmatpush.msra.mxu0 0.0
        %673 = vmatpush.msra.mxu0 %v652
        %674 = vmatmul.f32.gmra.mxu0 %v656
        %v675 = vpop.f32.mrf.mxu0
        %v676 = vadd.f32 0.0, %v675
        %677 = vdwg.mxu0
        %678 = vmatpush.msra.mxu0 0.0
        %679 = vmatpush.msra.mxu0 0.0
        %680 = vmatpush.msra.mxu0 0.0
        %681 = vmatpush.msra.mxu0 0.0
        %682 = vmatpush.msra.mxu0 0.0
        %683 = vmatpush.msra.mxu0 0.0
        %684 = vmatpush.msra.mxu0 0.0
        %685 = vmatpush.msra.mxu0 0.0
        %686 = vmatpush.msra.mxu0 0.0
        %687 = vmatpush.msra.mxu0 0.0
        %688 = vmatpush.msra.mxu0 0.0
        %689 = vmatpush.msra.mxu0 0.0
        %690 = vmatpush.msra.mxu0 0.0
        %691 = vmatpush.msra.mxu0 0.0
        %692 = vmatpush.msra.mxu0 0.0
        %693 = vmatpush.msra.mxu0 %v653
        %694 = vmatmul.f32.gmra.mxu0 %v656
        %v695 = vpop.f32.mrf.mxu0
        %v696 = vadd.f32 0.0, %v695
        %697 = vdwg.mxu0
        %v698 = vadd.f32 %v645, %v676
        %v699 = vadd.f32 %v646, %v696
        %v700 = vld [vmem:[%s1 + $0xa0] sm:$0xf]
        %702 = vset.pattern.permute.xlu0 0
        %703 = vperm.xlu0 %702, %v700
        %v704 = vpop.permute.xlu0 %703
        %v706 = vadd.f32 %v698, %v704
        %v707 = vadd.f32 %v699, %v704
        %v708 = vmax.f32 %v706, 0.0
        %v709 = vmax.f32 %v707, 0.0
        %v710 = vld [vmem:[%s1 + $0x50] sm:$0x3]
        %711 = vrot.lane.b32.xlu0 %v708, 127
        %v712 = vpop.permute.xlu0 %711
        %713 = vrot.lane.b32.xlu0 %v709, 127
        %v714 = vpop.permute.xlu0 %713
        %v715 = vsel %vm238, %v712, %v714
        %v716 = vsel %vm238, %v714, %v712
        %v717 = vld [vmem:[%s1 + $0x58] sm:$0x3]
        %v719 = vsel %vm180, %v717, 0
        %v722 = vsel %vm184, %v715, 0
        %v725 = vsel %vm184, %v716, 0
        %727 = vmatpush.msra.mxu0 0.0
        %728 = vmatpush.msra.mxu0 0.0
        %729 = vmatpush.msra.mxu0 0.0
        %730 = vmatpush.msra.mxu0 0.0
        %731 = vmatpush.msra.mxu0 0.0
        %732 = vmatpush.msra.mxu0 0.0
        %733 = vmatpush.msra.mxu0 0.0
        %734 = vmatpush.msra.mxu0 0.0
        %735 = vmatpush.msra.mxu0 0.0
        %736 = vmatpush.msra.mxu0 0.0
        %737 = vmatpush.msra.mxu0 0.0
        %738 = vmatpush.msra.mxu0 0.0
        %739 = vmatpush.msra.mxu0 0.0
        %740 = vmatpush.msra.mxu0 0.0
        %741 = vmatpush.msra.mxu0 0.0
        %742 = vmatpush.msra.mxu0 %v722
        %743 = vmatmul.f32.gmra.mxu0 %v719
        %v744 = vpop.f32.mrf.mxu0
        %v745 = vadd.f32 0.0, %v744
        %746 = vdwg.mxu0
        %747 = vmatpush.msra.mxu0 0.0
        %748 = vmatpush.msra.mxu0 0.0
        %749 = vmatpush.msra.mxu0 0.0
        %750 = vmatpush.msra.mxu0 0.0
        %751 = vmatpush.msra.mxu0 0.0
        %752 = vmatpush.msra.mxu0 0.0
        %753 = vmatpush.msra.mxu0 0.0
        %754 = vmatpush.msra.mxu0 0.0
        %755 = vmatpush.msra.mxu0 0.0
        %756 = vmatpush.msra.mxu0 0.0
        %757 = vmatpush.msra.mxu0 0.0
        %758 = vmatpush.msra.mxu0 0.0
        %759 = vmatpush.msra.mxu0 0.0
        %760 = vmatpush.msra.mxu0 0.0
        %761 = vmatpush.msra.mxu0 0.0
        %762 = vmatpush.msra.mxu0 %v725
        %763 = vmatmul.f32.gmra.mxu0 %v719
        %v764 = vpop.f32.mrf.mxu0
        %v765 = vadd.f32 0.0, %v764
        %766 = vdwg.mxu0
        %v768 = vsel %vm180, %v710, 0
        %v771 = vsel %vm184, %v708, 0
        %v774 = vsel %vm184, %v709, 0
        %776 = vmatpush.msra.mxu0 0.0
        %777 = vmatpush.msra.mxu0 0.0
        %778 = vmatpush.msra.mxu0 0.0
        %779 = vmatpush.msra.mxu0 0.0
        %780 = vmatpush.msra.mxu0 0.0
        %781 = vmatpush.msra.mxu0 0.0
        %782 = vmatpush.msra.mxu0 0.0
        %783 = vmatpush.msra.mxu0 0.0
        %784 = vmatpush.msra.mxu0 0.0
        %785 = vmatpush.msra.mxu0 0.0
        %786 = vmatpush.msra.mxu0 0.0
        %787 = vmatpush.msra.mxu0 0.0
        %788 = vmatpush.msra.mxu0 0.0
        %789 = vmatpush.msra.mxu0 0.0
        %790 = vmatpush.msra.mxu0 0.0
        %791 = vmatpush.msra.mxu0 %v771
        %792 = vmatmul.f32.gmra.mxu0 %v768
        %v793 = vpop.f32.mrf.mxu0
        %v794 = vadd.f32 %v745, %v793
        %795 = vdwg.mxu0
        %796 = vmatpush.msra.mxu0 0.0
        %797 = vmatpush.msra.mxu0 0.0
        %798 = vmatpush.msra.mxu0 0.0
        %799 = vmatpush.msra.mxu0 0.0
        %800 = vmatpush.msra.mxu0 0.0
        %801 = vmatpush.msra.mxu0 0.0
        %802 = vmatpush.msra.mxu0 0.0
        %803 = vmatpush.msra.mxu0 0.0
        %804 = vmatpush.msra.mxu0 0.0
        %805 = vmatpush.msra.mxu0 0.0
        %806 = vmatpush.msra.mxu0 0.0
        %807 = vmatpush.msra.mxu0 0.0
        %808 = vmatpush.msra.mxu0 0.0
        %809 = vmatpush.msra.mxu0 0.0
        %810 = vmatpush.msra.mxu0 0.0
        %811 = vmatpush.msra.mxu0 %v774
        %812 = vmatmul.f32.gmra.mxu0 %v768
        %v813 = vpop.f32.mrf.mxu0
        %v814 = vadd.f32 %v765, %v813
        %815 = vdwg.mxu0
        %816 = vrot.lane.b32.xlu0 %v708, 126
        %v817 = vpop.permute.xlu0 %816
        %818 = vrot.lane.b32.xlu0 %v709, 126
        %v819 = vpop.permute.xlu0 %818
        %v820 = vsel %vm333, %v817, %v819
        %v821 = vsel %vm333, %v819, %v817
        %v822 = vld [vmem:[%s1 + $0x60] sm:$0x3]
        %v824 = vsel %vm180, %v822, 0
        %v827 = vsel %vm184, %v820, 0
        %v830 = vsel %vm184, %v821, 0
        %832 = vmatpush.msra.mxu0 0.0
        %833 = vmatpush.msra.mxu0 0.0
        %834 = vmatpush.msra.mxu0 0.0
        %835 = vmatpush.msra.mxu0 0.0
        %836 = vmatpush.msra.mxu0 0.0
        %837 = vmatpush.msra.mxu0 0.0
        %838 = vmatpush.msra.mxu0 0.0
        %839 = vmatpush.msra.mxu0 0.0
        %840 = vmatpush.msra.mxu0 0.0
        %841 = vmatpush.msra.mxu0 0.0
        %842 = vmatpush.msra.mxu0 0.0
        %843 = vmatpush.msra.mxu0 0.0
        %844 = vmatpush.msra.mxu0 0.0
        %845 = vmatpush.msra.mxu0 0.0
        %846 = vmatpush.msra.mxu0 0.0
        %847 = vmatpush.msra.mxu0 %v827
        %848 = vmatmul.f32.gmra.mxu0 %v824
        %v849 = vpop.f32.mrf.mxu0
        %v850 = vadd.f32 0.0, %v849
        %851 = vdwg.mxu0
        %852 = vmatpush.msra.mxu0 0.0
        %853 = vmatpush.msra.mxu0 0.0
        %854 = vmatpush.msra.mxu0 0.0
        %855 = vmatpush.msra.mxu0 0.0
        %856 = vmatpush.msra.mxu0 0.0
        %857 = vmatpush.msra.mxu0 0.0
        %858 = vmatpush.msra.mxu0 0.0
        %859 = vmatpush.msra.mxu0 0.0
        %860 = vmatpush.msra.mxu0 0.0
        %861 = vmatpush.msra.mxu0 0.0
        %862 = vmatpush.msra.mxu0 0.0
        %863 = vmatpush.msra.mxu0 0.0
        %864 = vmatpush.msra.mxu0 0.0
        %865 = vmatpush.msra.mxu0 0.0
        %866 = vmatpush.msra.mxu0 0.0
        %867 = vmatpush.msra.mxu0 %v830
        %868 = vmatmul.f32.gmra.mxu0 %v824
        %v869 = vpop.f32.mrf.mxu0
        %v870 = vadd.f32 0.0, %v869
        %871 = vdwg.mxu0
        %v872 = vadd.f32 %v794, %v850
        %v873 = vadd.f32 %v814, %v870
        %874 = vrot.lane.b32.xlu0 %v708, 112
        %v875 = vpop.permute.xlu0 %874
        %876 = vrot.lane.b32.xlu0 %v709, 112
        %v877 = vpop.permute.xlu0 %876
        %v878 = vsel %vm386, %v875, %v877
        %v879 = vsel %vm386, %v877, %v875
        %v880 = vld [vmem:[%s1 + $0x68] sm:$0x3]
        %v882 = vsel %vm180, %v880, 0
        %v885 = vsel %vm184, %v878, 0
        %v888 = vsel %vm184, %v879, 0
        %890 = vmatpush.msra.mxu0 0.0
        %891 = vmatpush.msra.mxu0 0.0
        %892 = vmatpush.msra.mxu0 0.0
        %893 = vmatpush.msra.mxu0 0.0
        %894 = vmatpush.msra.mxu0 0.0
        %895 = vmatpush.msra.mxu0 0.0
        %896 = vmatpush.msra.mxu0 0.0
        %897 = vmatpush.msra.mxu0 0.0
        %898 = vmatpush.msra.mxu0 0.0
        %899 = vmatpush.msra.mxu0 0.0
        %900 = vmatpush.msra.mxu0 0.0
        %901 = vmatpush.msra.mxu0 0.0
        %902 = vmatpush.msra.mxu0 0.0
        %903 = vmatpush.msra.mxu0 0.0
        %904 = vmatpush.msra.mxu0 0.0
        %905 = vmatpush.msra.mxu0 %v885
        %906 = vmatmul.f32.gmra.mxu0 %v882
        %v907 = vpop.f32.mrf.mxu0
        %v908 = vadd.f32 0.0, %v907
        %909 = vdwg.mxu0
        %910 = vmatpush.msra.mxu0 0.0
        %911 = vmatpush.msra.mxu0 0.0
        %912 = vmatpush.msra.mxu0 0.0
        %913 = vmatpush.msra.mxu0 0.0
        %914 = vmatpush.msra.mxu0 0.0
        %915 = vmatpush.msra.mxu0 0.0
        %916 = vmatpush.msra.mxu0 0.0
        %917 = vmatpush.msra.mxu0 0.0
        %918 = vmatpush.msra.mxu0 0.0
        %919 = vmatpush.msra.mxu0 0.0
        %920 = vmatpush.msra.mxu0 0.0
        %921 = vmatpush.msra.mxu0 0.0
        %922 = vmatpush.msra.mxu0 0.0
        %923 = vmatpush.msra.mxu0 0.0
        %924 = vmatpush.msra.mxu0 0.0
        %925 = vmatpush.msra.mxu0 %v888
        %926 = vmatmul.f32.gmra.mxu0 %v882
        %v927 = vpop.f32.mrf.mxu0
        %v928 = vadd.f32 0.0, %v927
        %929 = vdwg.mxu0
        %v930 = vadd.f32 %v872, %v908
        %v931 = vadd.f32 %v873, %v928
        %932 = vrot.lane.b32.xlu0 %v708, 111
        %v933 = vpop.permute.xlu0 %932
        %934 = vrot.lane.b32.xlu0 %v709, 111
        %v935 = vpop.permute.xlu0 %934
        %v936 = vsel %vm439, %v933, %v935
        %v937 = vsel %vm439, %v935, %v933
        %v938 = vld [vmem:[%s1 + $0x70] sm:$0x3]
        %v940 = vsel %vm180, %v938, 0
        %v943 = vsel %vm184, %v936, 0
        %v946 = vsel %vm184, %v937, 0
        %948 = vmatpush.msra.mxu0 0.0
        %949 = vmatpush.msra.mxu0 0.0
        %950 = vmatpush.msra.mxu0 0.0
        %951 = vmatpush.msra.mxu0 0.0
        %952 = vmatpush.msra.mxu0 0.0
        %953 = vmatpush.msra.mxu0 0.0
        %954 = vmatpush.msra.mxu0 0.0
        %955 = vmatpush.msra.mxu0 0.0
        %956 = vmatpush.msra.mxu0 0.0
        %957 = vmatpush.msra.mxu0 0.0
        %958 = vmatpush.msra.mxu0 0.0
        %959 = vmatpush.msra.mxu0 0.0
        %960 = vmatpush.msra.mxu0 0.0
        %961 = vmatpush.msra.mxu0 0.0
        %962 = vmatpush.msra.mxu0 0.0
        %963 = vmatpush.msra.mxu0 %v943
        %964 = vmatmul.f32.gmra.mxu0 %v940
        %v965 = vpop.f32.mrf.mxu0
        %v966 = vadd.f32 0.0, %v965
        %967 = vdwg.mxu0
        %968 = vmatpush.msra.mxu0 0.0
        %969 = vmatpush.msra.mxu0 0.0
        %970 = vmatpush.msra.mxu0 0.0
        %971 = vmatpush.msra.mxu0 0.0
        %972 = vmatpush.msra.mxu0 0.0
        %973 = vmatpush.msra.mxu0 0.0
        %974 = vmatpush.msra.mxu0 0.0
        %975 = vmatpush.msra.mxu0 0.0
        %976 = vmatpush.msra.mxu0 0.0
        %977 = vmatpush.msra.mxu0 0.0
        %978 = vmatpush.msra.mxu0 0.0
        %979 = vmatpush.msra.mxu0 0.0
        %980 = vmatpush.msra.mxu0 0.0
        %981 = vmatpush.msra.mxu0 0.0
        %982 = vmatpush.msra.mxu0 0.0
        %983 = vmatpush.msra.mxu0 %v946
        %984 = vmatmul.f32.gmra.mxu0 %v940
        %v985 = vpop.f32.mrf.mxu0
        %v986 = vadd.f32 0.0, %v985
        %987 = vdwg.mxu0
        %v988 = vadd.f32 %v930, %v966
        %v989 = vadd.f32 %v931, %v986
        %990 = vrot.lane.b32.xlu0 %v708, 110
        %v991 = vpop.permute.xlu0 %990
        %992 = vrot.lane.b32.xlu0 %v709, 110
        %v993 = vpop.permute.xlu0 %992
        %v994 = vsel %vm492, %v991, %v993
        %v995 = vsel %vm492, %v993, %v991
        %v996 = vld [vmem:[%s1 + $0x78] sm:$0x3]
        %v998 = vsel %vm180, %v996, 0
        %v1001 = vsel %vm184, %v994, 0
        %v1004 = vsel %vm184, %v995, 0
        %1006 = vmatpush.msra.mxu0 0.0
        %1007 = vmatpush.msra.mxu0 0.0
        %1008 = vmatpush.msra.mxu0 0.0
        %1009 = vmatpush.msra.mxu0 0.0
        %1010 = vmatpush.msra.mxu0 0.0
        %1011 = vmatpush.msra.mxu0 0.0
        %1012 = vmatpush.msra.mxu0 0.0
        %1013 = vmatpush.msra.mxu0 0.0
        %1014 = vmatpush.msra.mxu0 0.0
        %1015 = vmatpush.msra.mxu0 0.0
        %1016 = vmatpush.msra.mxu0 0.0
        %1017 = vmatpush.msra.mxu0 0.0
        %1018 = vmatpush.msra.mxu0 0.0
        %1019 = vmatpush.msra.mxu0 0.0
        %1020 = vmatpush.msra.mxu0 0.0
        %1021 = vmatpush.msra.mxu0 %v1001
        %1022 = vmatmul.f32.gmra.mxu0 %v998
        %v1023 = vpop.f32.mrf.mxu0
        %v1024 = vadd.f32 0.0, %v1023
        %1025 = vdwg.mxu0
        %1026 = vmatpush.msra.mxu0 0.0
        %1027 = vmatpush.msra.mxu0 0.0
        %1028 = vmatpush.msra.mxu0 0.0
        %1029 = vmatpush.msra.mxu0 0.0
        %1030 = vmatpush.msra.mxu0 0.0
        %1031 = vmatpush.msra.mxu0 0.0
        %1032 = vmatpush.msra.mxu0 0.0
        %1033 = vmatpush.msra.mxu0 0.0
        %1034 = vmatpush.msra.mxu0 0.0
        %1035 = vmatpush.msra.mxu0 0.0
        %1036 = vmatpush.msra.mxu0 0.0
        %1037 = vmatpush.msra.mxu0 0.0
        %1038 = vmatpush.msra.mxu0 0.0
        %1039 = vmatpush.msra.mxu0 0.0
        %1040 = vmatpush.msra.mxu0 0.0
        %1041 = vmatpush.msra.mxu0 %v1004
        %1042 = vmatmul.f32.gmra.mxu0 %v998
        %v1043 = vpop.f32.mrf.mxu0
        %v1044 = vadd.f32 0.0, %v1043
        %1045 = vdwg.mxu0
        %v1046 = vadd.f32 %v988, %v1024
        %v1047 = vadd.f32 %v989, %v1044
        %1048 = vrot.lane.b32.xlu0 %v708, 96
        %v1049 = vpop.permute.xlu0 %1048
        %1050 = vrot.lane.b32.xlu0 %v709, 96
        %v1051 = vpop.permute.xlu0 %1050
        %v1052 = vsel %vm545, %v1049, %v1051
        %v1053 = vsel %vm545, %v1051, %v1049
        %v1054 = vld [vmem:[%s1 + $0x80] sm:$0x3]
        %v1056 = vsel %vm180, %v1054, 0
        %v1059 = vsel %vm184, %v1052, 0
        %v1062 = vsel %vm184, %v1053, 0
        %1064 = vmatpush.msra.mxu0 0.0
        %1065 = vmatpush.msra.mxu0 0.0
        %1066 = vmatpush.msra.mxu0 0.0
        %1067 = vmatpush.msra.mxu0 0.0
        %1068 = vmatpush.msra.mxu0 0.0
        %1069 = vmatpush.msra.mxu0 0.0
        %1070 = vmatpush.msra.mxu0 0.0
        %1071 = vmatpush.msra.mxu0 0.0
        %1072 = vmatpush.msra.mxu0 0.0
        %1073 = vmatpush.msra.mxu0 0.0
        %1074 = vmatpush.msra.mxu0 0.0
        %1075 = vmatpush.msra.mxu0 0.0
        %1076 = vmatpush.msra.mxu0 0.0
        %1077 = vmatpush.msra.mxu0 0.0
        %1078 = vmatpush.msra.mxu0 0.0
        %1079 = vmatpush.msra.mxu0 %v1059
        %1080 = vmatmul.f32.gmra.mxu0 %v1056
        %v1081 = vpop.f32.mrf.mxu0
        %v1082 = vadd.f32 0.0, %v1081
        %1083 = vdwg.mxu0
        %1084 = vmatpush.msra.mxu0 0.0
        %1085 = vmatpush.msra.mxu0 0.0
        %1086 = vmatpush.msra.mxu0 0.0
        %1087 = vmatpush.msra.mxu0 0.0
        %1088 = vmatpush.msra.mxu0 0.0
        %1089 = vmatpush.msra.mxu0 0.0
        %1090 = vmatpush.msra.mxu0 0.0
        %1091 = vmatpush.msra.mxu0 0.0
        %1092 = vmatpush.msra.mxu0 0.0
        %1093 = vmatpush.msra.mxu0 0.0
        %1094 = vmatpush.msra.mxu0 0.0
        %1095 = vmatpush.msra.mxu0 0.0
        %1096 = vmatpush.msra.mxu0 0.0
        %1097 = vmatpush.msra.mxu0 0.0
        %1098 = vmatpush.msra.mxu0 0.0
        %1099 = vmatpush.msra.mxu0 %v1062
        %1100 = vmatmul.f32.gmra.mxu0 %v1056
        %v1101 = vpop.f32.mrf.mxu0
        %v1102 = vadd.f32 0.0, %v1101
        %1103 = vdwg.mxu0
        %v1104 = vadd.f32 %v1046, %v1082
        %v1105 = vadd.f32 %v1047, %v1102
        %1106 = vrot.lane.b32.xlu0 %v708, 95
        %v1107 = vpop.permute.xlu0 %1106
        %1108 = vrot.lane.b32.xlu0 %v709, 95
        %v1109 = vpop.permute.xlu0 %1108
        %v1110 = vsel %vm598, %v1107, %v1109
        %v1111 = vsel %vm598, %v1109, %v1107
        %v1112 = vld [vmem:[%s1 + $0x88] sm:$0x3]
        %v1114 = vsel %vm180, %v1112, 0
        %v1117 = vsel %vm184, %v1110, 0
        %v1120 = vsel %vm184, %v1111, 0
        %1122 = vmatpush.msra.mxu0 0.0
        %1123 = vmatpush.msra.mxu0 0.0
        %1124 = vmatpush.msra.mxu0 0.0
        %1125 = vmatpush.msra.mxu0 0.0
        %1126 = vmatpush.msra.mxu0 0.0
        %1127 = vmatpush.msra.mxu0 0.0
        %1128 = vmatpush.msra.mxu0 0.0
        %1129 = vmatpush.msra.mxu0 0.0
        %1130 = vmatpush.msra.mxu0 0.0
        %1131 = vmatpush.msra.mxu0 0.0
        %1132 = vmatpush.msra.mxu0 0.0
        %1133 = vmatpush.msra.mxu0 0.0
        %1134 = vmatpush.msra.mxu0 0.0
        %1135 = vmatpush.msra.mxu0 0.0
        %1136 = vmatpush.msra.mxu0 0.0
        %1137 = vmatpush.msra.mxu0 %v1117
        %1138 = vmatmul.f32.gmra.mxu0 %v1114
        %v1139 = vpop.f32.mrf.mxu0
        %v1140 = vadd.f32 0.0, %v1139
        %1141 = vdwg.mxu0
        %1142 = vmatpush.msra.mxu0 0.0
        %1143 = vmatpush.msra.mxu0 0.0
        %1144 = vmatpush.msra.mxu0 0.0
        %1145 = vmatpush.msra.mxu0 0.0
        %1146 = vmatpush.msra.mxu0 0.0
        %1147 = vmatpush.msra.mxu0 0.0
        %1148 = vmatpush.msra.mxu0 0.0
        %1149 = vmatpush.msra.mxu0 0.0
        %1150 = vmatpush.msra.mxu0 0.0
        %1151 = vmatpush.msra.mxu0 0.0
        %1152 = vmatpush.msra.mxu0 0.0
        %1153 = vmatpush.msra.mxu0 0.0
        %1154 = vmatpush.msra.mxu0 0.0
        %1155 = vmatpush.msra.mxu0 0.0
        %1156 = vmatpush.msra.mxu0 0.0
        %1157 = vmatpush.msra.mxu0 %v1120
        %1158 = vmatmul.f32.gmra.mxu0 %v1114
        %v1159 = vpop.f32.mrf.mxu0
        %v1160 = vadd.f32 0.0, %v1159
        %1161 = vdwg.mxu0
        %v1162 = vadd.f32 %v1104, %v1140
        %v1163 = vadd.f32 %v1105, %v1160
        %1164 = vrot.lane.b32.xlu0 %v708, 94
        %v1165 = vpop.permute.xlu0 %1164
        %1166 = vrot.lane.b32.xlu0 %v709, 94
        %v1167 = vpop.permute.xlu0 %1166
        %v1168 = vsel %vm651, %v1165, %v1167
        %v1169 = vsel %vm651, %v1167, %v1165
        %v1170 = vld [vmem:[%s1 + $0x90] sm:$0x3]
        %v1172 = vsel %vm180, %v1170, 0
        %v1175 = vsel %vm184, %v1168, 0
        %v1178 = vsel %vm184, %v1169, 0
        %1180 = vmatpush.msra.mxu0 0.0
        %1181 = vmatpush.msra.mxu0 0.0
        %1182 = vmatpush.msra.mxu0 0.0
        %1183 = vmatpush.msra.mxu0 0.0
        %1184 = vmatpush.msra.mxu0 0.0
        %1185 = vmatpush.msra.mxu0 0.0
        %1186 = vmatpush.msra.mxu0 0.0
        %1187 = vmatpush.msra.mxu0 0.0
        %1188 = vmatpush.msra.mxu0 0.0
        %1189 = vmatpush.msra.mxu0 0.0
        %1190 = vmatpush.msra.mxu0 0.0
        %1191 = vmatpush.msra.mxu0 0.0
        %1192 = vmatpush.msra.mxu0 0.0
        %1193 = vmatpush.msra.mxu0 0.0
        %1194 = vmatpush.msra.mxu0 0.0
        %1195 = vmatpush.msra.mxu0 %v1175
        %1196 = vmatmul.f32.gmra.mxu0 %v1172
        %v1197 = vpop.f32.mrf.mxu0
        %v1198 = vadd.f32 0.0, %v1197
        %1199 = vdwg.mxu0
        %1200 = vmatpush.msra.mxu0 0.0
        %1201 = vmatpush.msra.mxu0 0.0
        %1202 = vmatpush.msra.mxu0 0.0
        %1203 = vmatpush.msra.mxu0 0.0
        %1204 = vmatpush.msra.mxu0 0.0
        %1205 = vmatpush.msra.mxu0 0.0
        %1206 = vmatpush.msra.mxu0 0.0
        %1207 = vmatpush.msra.mxu0 0.0
        %1208 = vmatpush.msra.mxu0 0.0
        %1209 = vmatpush.msra.mxu0 0.0
        %1210 = vmatpush.msra.mxu0 0.0
        %1211 = vmatpush.msra.mxu0 0.0
        %1212 = vmatpush.msra.mxu0 0.0
        %1213 = vmatpush.msra.mxu0 0.0
        %1214 = vmatpush.msra.mxu0 0.0
        %1215 = vmatpush.msra.mxu0 %v1178
        %1216 = vmatmul.f32.gmra.mxu0 %v1172
        %v1217 = vpop.f32.mrf.mxu0
        %v1218 = vadd.f32 0.0, %v1217
        %1219 = vdwg.mxu0
        %v1220 = vadd.f32 %v1162, %v1198
        %v1221 = vadd.f32 %v1163, %v1218
        %v1222 = vld [vmem:[%s1 + $0xa8] sm:$0x3]
        %1224 = vset.pattern.permute.xlu0 0
        %1225 = vperm.xlu0 %1224, %v1222
        %v1226 = vpop.permute.xlu0 %1225
        %v1228 = vadd.f32 %v1220, %v1226
        %v1229 = vadd.f32 %v1221, %v1226
        %v1230 = vmax.f32 %v1228, 0.0
        %v1231 = vmax.f32 %v1229, 0.0
        %v1232 = vld [vmem:[%s2] sm:$0xff]
        %v1233 = vld [vmem:[%s2 + $0x8] sm:$0xff]
        %v1234 = vld [vmem:[%s2 + $0x10] sm:$0xff]
        %v1235 = vld [vmem:[%s2 + $0x18] sm:$0xff]
        %v1236 = vld [vmem:[%s2 + $0x20] sm:$0xff]
        %v1237 = vld [vmem:[%s2 + $0x28] sm:$0xff]
        %v1238 = vld [vmem:[%s2 + $0x30] sm:$0xff]
        %v1239 = vld [vmem:[%s2 + $0x38] sm:$0xff]
        %v1240 = vld [vmem:[%s2 + $0x40] sm:$0xff]
        %v1241 = vld [vmem:[%s2 + $0x48] sm:$0xff]
        %v1242 = vld [vmem:[%s2 + $0x50] sm:$0xff]
        %v1243 = vld [vmem:[%s2 + $0x58] sm:$0xff]
        %v1244 = vld [vmem:[%s2 + $0x60] sm:$0xff]
        %v1245 = vld [vmem:[%s2 + $0x68] sm:$0xff]
        %v1246 = vld [vmem:[%s2 + $0x70] sm:$0xff]
        %v1247 = vld [vmem:[%s2 + $0x78] sm:$0xff]
        %v1248 = vld [vmem:[%s2 + $0x80] sm:$0xff]
        %v1249 = vld [vmem:[%s2 + $0x88] sm:$0xff]
        %v1250 = vld [vmem:[%s2 + $0x90] sm:$0xff]
        %v1251 = vld [vmem:[%s2 + $0x98] sm:$0xff]
        %v1252 = vld [vmem:[%s2 + $0xa0] sm:$0xff]
        %v1253 = vld [vmem:[%s2 + $0xa8] sm:$0xff]
        %v1254 = vld [vmem:[%s2 + $0xb0] sm:$0xff]
        %v1255 = vld [vmem:[%s2 + $0xb8] sm:$0xff]
        %v1256 = vld [vmem:[%s2 + $0xc0] sm:$0xff]
        %v1257 = vld [vmem:[%s2 + $0xc8] sm:$0xff]
        %v1258 = vld [vmem:[%s2 + $0xd0] sm:$0xff]
        %v1259 = vld [vmem:[%s2 + $0xd8] sm:$0xff]
        %v1260 = vld [vmem:[%s2 + $0xe0] sm:$0xff]
        %v1261 = vld [vmem:[%s2 + $0xe8] sm:$0xff]
        %v1262 = vld [vmem:[%s2 + $0xf0] sm:$0xff]
        %v1263 = vld [vmem:[%s2 + $0xf8] sm:$0xff]
        %v1264 = vld [vmem:[%s2 + $0x100] sm:$0xff]
        %v1265 = vld [vmem:[%s2 + $0x108] sm:$0xff]
        %v1266 = vld [vmem:[%s2 + $0x110] sm:$0xff]
        %v1267 = vld [vmem:[%s2 + $0x118] sm:$0xff]
        %v1268 = vld [vmem:[%s2 + $0x120] sm:$0xff]
        %v1269 = vld [vmem:[%s2 + $0x128] sm:$0xff]
        %v1270 = vld [vmem:[%s2 + $0x130] sm:$0xff]
        %v1271 = vld [vmem:[%s2 + $0x138] sm:$0xff]
        %v1272 = vld [vmem:[%s2 + $0x140] sm:$0xff]
        %v1273 = vld [vmem:[%s2 + $0x148] sm:$0xff]
        %v1274 = vld [vmem:[%s2 + $0x150] sm:$0xff]
        %v1275 = vld [vmem:[%s2 + $0x158] sm:$0xff]
        %v1276 = vld [vmem:[%s2 + $0x160] sm:$0xff]
        %v1277 = vld [vmem:[%s2 + $0x168] sm:$0xff]
        %v1278 = vld [vmem:[%s2 + $0x170] sm:$0xff]
        %v1279 = vld [vmem:[%s2 + $0x178] sm:$0xff]
        %v1280 = vld [vmem:[%s2 + $0x180] sm:$0xff]
        %v1281 = vld [vmem:[%s2 + $0x188] sm:$0xff]
        %v1282 = vld [vmem:[%s2 + $0x190] sm:$0xff]
        %v1283 = vld [vmem:[%s2 + $0x198] sm:$0xff]
        %v1284 = vld [vmem:[%s2 + $0x1a0] sm:$0xff]
        %v1285 = vld [vmem:[%s2 + $0x1a8] sm:$0xff]
        %v1286 = vld [vmem:[%s2 + $0x1b0] sm:$0xff]
        %v1287 = vld [vmem:[%s2 + $0x1b8] sm:$0xff]
        %v1288 = vld [vmem:[%s2 + $0x1c0] sm:$0xff]
        %v1289 = vld [vmem:[%s2 + $0x1c8] sm:$0xff]
        %v1290 = vld [vmem:[%s2 + $0x1d0] sm:$0xff]
        %v1291 = vld [vmem:[%s2 + $0x1d8] sm:$0xff]
        %v1292 = vld [vmem:[%s2 + $0x1e0] sm:$0xff]
        %v1293 = vld [vmem:[%s2 + $0x1e8] sm:$0xff]
        %v1294 = vld [vmem:[%s2 + $0x1f0] sm:$0xff]
        %v1295 = vld [vmem:[%s2 + $0x1f8] sm:$0xff]
        %v1298 = vrot.slane %v1230, 1
        %v1299 = vrot.slane %v1231, 1
        %1302 = vmatpush.msra.mxu0 %v1279
        %1303 = vmatpush.msra.mxu0 %v1278
        %1304 = vmatpush.msra.mxu0 %v1277
        %1305 = vmatpush.msra.mxu0 %v1276
        %1306 = vmatpush.msra.mxu0 %v1275
        %1307 = vmatpush.msra.mxu0 %v1274
        %1308 = vmatpush.msra.mxu0 %v1273
        %1309 = vmatpush.msra.mxu0 %v1272
        %1310 = vmatpush.msra.mxu0 %v1271
        %1311 = vmatpush.msra.mxu0 %v1270
        %1312 = vmatpush.msra.mxu0 %v1269
        %1313 = vmatpush.msra.mxu0 %v1268
        %1314 = vmatpush.msra.mxu0 %v1267
        %1315 = vmatpush.msra.mxu0 %v1266
        %1316 = vmatpush.msra.mxu0 %v1265
        %1317 = vmatpush.msra.mxu0 %v1264
        %1318 = vmatmul.f32.gmra.mxu0 %v1298
        %v1319 = vpop.f32.mrf.mxu0
        %v1320 = vadd.f32 0.0, %v1319
        %1321 = vdwg.mxu0
        %1322 = vmatpush.msra.mxu0 %v1295
        %1323 = vmatpush.msra.mxu0 %v1294
        %1324 = vmatpush.msra.mxu0 %v1293
        %1325 = vmatpush.msra.mxu0 %v1292
        %1326 = vmatpush.msra.mxu0 %v1291
        %1327 = vmatpush.msra.mxu0 %v1290
        %1328 = vmatpush.msra.mxu0 %v1289
        %1329 = vmatpush.msra.mxu0 %v1288
        %1330 = vmatpush.msra.mxu0 %v1287
        %1331 = vmatpush.msra.mxu0 %v1286
        %1332 = vmatpush.msra.mxu0 %v1285
        %1333 = vmatpush.msra.mxu0 %v1284
        %1334 = vmatpush.msra.mxu0 %v1283
        %1335 = vmatpush.msra.mxu0 %v1282
        %1336 = vmatpush.msra.mxu0 %v1281
        %1337 = vmatpush.msra.mxu0 %v1280
        %1338 = vmatmul.f32.gmra.mxu0 %v1299
        %v1339 = vpop.f32.mrf.mxu0
        %v1340 = vadd.f32 %v1320, %v1339
        %1341 = vdwg.mxu0
        %1342 = vmatpush.msra.mxu0 %v1247
        %1343 = vmatpush.msra.mxu0 %v1246
        %1344 = vmatpush.msra.mxu0 %v1245
        %1345 = vmatpush.msra.mxu0 %v1244
        %1346 = vmatpush.msra.mxu0 %v1243
        %1347 = vmatpush.msra.mxu0 %v1242
        %1348 = vmatpush.msra.mxu0 %v1241
        %1349 = vmatpush.msra.mxu0 %v1240
        %1350 = vmatpush.msra.mxu0 %v1239
        %1351 = vmatpush.msra.mxu0 %v1238
        %1352 = vmatpush.msra.mxu0 %v1237
        %1353 = vmatpush.msra.mxu0 %v1236
        %1354 = vmatpush.msra.mxu0 %v1235
        %1355 = vmatpush.msra.mxu0 %v1234
        %1356 = vmatpush.msra.mxu0 %v1233
        %1357 = vmatpush.msra.mxu0 %v1232
        %1358 = vmatmul.f32.gmra.mxu0 %v1230
        %v1359 = vpop.f32.mrf.mxu0
        %v1360 = vadd.f32 %v1340, %v1359
        %1361 = vdwg.mxu0
        %1362 = vmatpush.msra.mxu0 %v1263
        %1363 = vmatpush.msra.mxu0 %v1262
        %1364 = vmatpush.msra.mxu0 %v1261
        %1365 = vmatpush.msra.mxu0 %v1260
        %1366 = vmatpush.msra.mxu0 %v1259
        %1367 = vmatpush.msra.mxu0 %v1258
        %1368 = vmatpush.msra.mxu0 %v1257
        %1369 = vmatpush.msra.mxu0 %v1256
        %1370 = vmatpush.msra.mxu0 %v1255
        %1371 = vmatpush.msra.mxu0 %v1254
        %1372 = vmatpush.msra.mxu0 %v1253
        %1373 = vmatpush.msra.mxu0 %v1252
        %1374 = vmatpush.msra.mxu0 %v1251
        %1375 = vmatpush.msra.mxu0 %v1250
        %1376 = vmatpush.msra.mxu0 %v1249
        %1377 = vmatpush.msra.mxu0 %v1248
        %1378 = vmatmul.f32.gmra.mxu0 %v1231
        %v1379 = vpop.f32.mrf.mxu0
        %v1380 = vadd.f32 %v1360, %v1379
        %1381 = vdwg.mxu0
        %v1382 = vld [vmem:[%s2 + $0x290] sm:$0x1]
        %v1383 = vadd.f32 %v1380, %v1382
        %v1384 = vmax.f32 %v1383, 0.0
        %v1385 = vld [vmem:[%s2 + $0x200] sm:$0xff]
        %v1386 = vld [vmem:[%s2 + $0x208] sm:$0xff]
        %v1387 = vld [vmem:[%s2 + $0x210] sm:$0xff]
        %v1388 = vld [vmem:[%s2 + $0x218] sm:$0xff]
        %v1389 = vld [vmem:[%s2 + $0x298] sm:$0x1]
        %vm1390 = vcmask 261120
        %v1392 = vsel %vm1390, %v1384, 0
        %1394 = vmatpush.msra.mxu0 0.0
        %1395 = vmatpush.msra.mxu0 0.0
        %1396 = vmatpush.msra.mxu0 0.0
        %1397 = vmatpush.msra.mxu0 0.0
        %1398 = vmatpush.msra.mxu0 0.0
        %1399 = vmatpush.msra.mxu0 0.0
        %1400 = vmatpush.msra.mxu0 0.0
        %1401 = vmatpush.msra.mxu0 0.0
        %1402 = vmatpush.msra.mxu0 0.0
        %1403 = vmatpush.msra.mxu0 0.0
        %1404 = vmatpush.msra.mxu0 0.0
        %1405 = vmatpush.msra.mxu0 0.0
        %1406 = vmatpush.msra.mxu0 %v1388
        %1407 = vmatpush.msra.mxu0 %v1387
        %1408 = vmatpush.msra.mxu0 %v1386
        %1409 = vmatpush.msra.mxu0 %v1385
        %1410 = vmatmul.f32.gmra.mxu0 %v1392
        %v1411 = vpop.f32.mrf.mxu0
        %v1412 = vadd.f32 %v1389, %v1411
        %1413 = vdwg.mxu0
        %v1414 = vmax.f32 %v1412, 0.0
        %v1415 = vld [vmem:[%s2 + $0x220] sm:$0xff]
        %v1416 = vld [vmem:[%s2 + $0x228] sm:$0xff]
        %v1417 = vld [vmem:[%s2 + $0x230] sm:$0xff]
        %v1418 = vld [vmem:[%s2 + $0x238] sm:$0xff]
        %v1419 = vld [vmem:[%s2 + $0x240] sm:$0xff]
        %v1420 = vld [vmem:[%s2 + $0x248] sm:$0xff]
        %v1421 = vld [vmem:[%s2 + $0x250] sm:$0xff]
        %v1422 = vld [vmem:[%s2 + $0x258] sm:$0xff]
        %v1423 = vld [vmem:[%s2 + $0x2a0] sm:$0x1]
        %vm1424 = vcmask 523264
        %v1426 = vsel %vm1424, %v1414, 0
        %1428 = vmatpush.msra.mxu0 0.0
        %1429 = vmatpush.msra.mxu0 0.0
        %1430 = vmatpush.msra.mxu0 0.0
        %1431 = vmatpush.msra.mxu0 0.0
        %1432 = vmatpush.msra.mxu0 0.0
        %1433 = vmatpush.msra.mxu0 0.0
        %1434 = vmatpush.msra.mxu0 0.0
        %1435 = vmatpush.msra.mxu0 0.0
        %1436 = vmatpush.msra.mxu0 %v1422
        %1437 = vmatpush.msra.mxu0 %v1421
        %1438 = vmatpush.msra.mxu0 %v1420
        %1439 = vmatpush.msra.mxu0 %v1419
        %1440 = vmatpush.msra.mxu0 %v1418
        %1441 = vmatpush.msra.mxu0 %v1417
        %1442 = vmatpush.msra.mxu0 %v1416
        %1443 = vmatpush.msra.mxu0 %v1415
        %1444 = vmatmul.f32.gmra.mxu0 %v1426
        %v1445 = vpop.f32.mrf.mxu0
        %v1446 = vadd.f32 %v1423, %v1445
        %1447 = vdwg.mxu0
        %v1448 = vmax.f32 %v1446, 0.0
        %v1449 = vld [vmem:[%s2 + $0x260] sm:$0xff]
        %v1450 = vld [vmem:[%s2 + $0x268] sm:$0xff]
        %v1451 = vld [vmem:[%s2 + $0x270] sm:$0xff]
        %v1452 = vld [vmem:[%s2 + $0x278] sm:$0xff]
        %v1453 = vld [vmem:[%s2 + $0x280] sm:$0xff]
        %v1454 = vld [vmem:[%s2 + $0x288] sm:$0xff]
        %v1455 = vld [vmem:[%s2 + $0x2a8] sm:$0x1]
        %vm1456 = vcmask 392192
        %v1458 = vsel %vm1456, %v1448, 0
        %1460 = vmatpush.msra.mxu0 0.0
        %1461 = vmatpush.msra.mxu0 0.0
        %1462 = vmatpush.msra.mxu0 0.0
        %1463 = vmatpush.msra.mxu0 0.0
        %1464 = vmatpush.msra.mxu0 0.0
        %1465 = vmatpush.msra.mxu0 0.0
        %1466 = vmatpush.msra.mxu0 0.0
        %1467 = vmatpush.msra.mxu0 0.0
        %1468 = vmatpush.msra.mxu0 0.0
        %1469 = vmatpush.msra.mxu0 0.0
        %1470 = vmatpush.msra.mxu0 %v1454
        %1471 = vmatpush.msra.mxu0 %v1453
        %1472 = vmatpush.msra.mxu0 %v1452
        %1473 = vmatpush.msra.mxu0 %v1451
        %1474 = vmatpush.msra.mxu0 %v1450
        %1475 = vmatpush.msra.mxu0 %v1449
        %1476 = vmatmul.f32.gmra.mxu0 %v1458
        %v1477 = vpop.f32.mrf.mxu0
        %v1478 = vadd.f32 %v1455, %v1477
        %1479 = vdwg.mxu0
        %vm1480 = vcmask 122880
        %1481 = vst.msk [vmem:[%s162] sm:$0x1] %vm1480, %v1478
        %s1482 = sand.u32 %s93, 1
        %s1483 = scalar_lea.sflag [#allocation3], %s1482
        %s1484 = sand.u32 %s93, 1
        %s1485 = scalar_lea.vmem [#allocation2], %s1484
        // Predicated region
        $region33: #{tpu_custom_call.1} parent=31 // pred_check
          %p1486 = pneg %p103
        $region34: #{tpu_custom_call.1} parent=31 // pred_check_branch
          %1488 = sbr.rel (%p1486) target = $region36
        $region35: #{tpu_custom_call.1} parent=31 // pred_region
          %1490 = vsyncadd %s1483, 0
          %s1491 = scalar_lea.hbm %s3, %s17
          %s1493 = sshll.u32 %s1485, 4
          %s1494 = int_to_ptr.vmem [resolvable:$true] %s1493
          %s1495 = sshll.u32 %s1491, 4
          %s1496 = int_to_ptr.hbm [resolvable:$true] %s1495
          %1498 = dma.vmem_to_hbm [thread:$0]  %s1494, 16, %s1496, %s1483
        $region36: #{tpu_custom_call.1} parent=31 // pred_fallthru
          _
      $region32: #{tpu_custom_call.1} parent=5 // pred_fallthru
        _
      %p1499 = scmp.le.s32.totalorder 2, %s12
      // Predicated region
      $region37: #{tpu_custom_call.1} parent=5 // pred_check
        %p1500 = pneg %p1499
      $region38: #{tpu_custom_call.1} parent=5 // pred_check_branch
        %1502 = sbr.rel (%p1500) target = $region40
      $region39: #{tpu_custom_call.1} parent=5 // pred_region
        %s1503 = ssub.s32 %s12, 2
        // Predicated region
        $region41: #{tpu_custom_call.1} parent=39 // pred_check
          %p1504 = pneg %p109
        $region42: #{tpu_custom_call.1} parent=39 // pred_check_branch
          %1506 = sbr.rel (%p1504) target = $region44
        $region43: #{tpu_custom_call.1} parent=39 // pred_region
          %s1507 = sand.u32 %s94, 1
          %s1508 = scalar_lea.sflag [#allocation3], %s1507
          %s1509 = sand.u32 %s94, 1
          %s1510 = scalar_lea.vmem [#allocation2], %s1509
          %1512 = dma.done %s1508, 16
        $region44: #{tpu_custom_call.1} parent=39 // pred_fallthru
          _
      $region40: #{tpu_custom_call.1} parent=5 // pred_fallthru
        _
    $region6: #{tpu_custom_call.1} parent=1 // loop_footer
      %s16 = sadd.s32 1, %s12
    $region7: #{tpu_custom_call.1} parent=1 // loop_footer_branch
      %11 = sbr.rel target = $region3
    $region8: #{tpu_custom_call.1} parent=1 // loop_exit
      _
    %1513 = vsyncpa [#allocation3], 1
    %s1514 = scalar_lea.sflag [#allocation3], 1
    %1515 = vsyncpa %s1514, 1

</llo_original>
